<compile_context>
chip_gen: v6e
topology: v6e:2x2x1
jax: 0.10.0
libtpu: 0.0.40
codegen_flags: <defaults>
</compile_context>

<pallas_src>
import functools

import jax
import jax.numpy as jnp
from jax.experimental import pallas as pl
from jax.experimental.pallas import tpu as pltpu

LANE = 128
SUBLANE = 8
MAX_BATCH_TILE = 1024


def _round_up(x, m):
    return (x + m - 1) // m * m


def _num_tensorcores():
    """Best-effort TensorCores-per-device (v7x exposes 2 to a single Pallas grid)."""
    try:
        kind = jax.devices()[0].device_kind.lower()
    except Exception:
        return 1
    return 2 if "7" in kind else 1  # v5e / v6e are single-TC


def _choose_batch_tile(batch, num_cores):
    # One grid step per TensorCore, each as large as possible (capped) so the
    # per-step pipeline overhead is paid as few times as possible.
    tile = _round_up(pl.cdiv(batch, max(num_cores, 1)), SUBLANE)
    return max(SUBLANE, min(tile, MAX_BATCH_TILE))


def _fnn_kernel(x_ref, w_ref, b_ref, o_ref):
    """Whole fused MLP forward for one batch tile, entirely in VMEM.

    x_ref: [tile, in_w]   (true / sublane-rounded input width, no lane padding)
    w_ref: [L, P, P]      ([in, out] per layer, zero-padded to lane-full P)
    b_ref: [L, P]
    o_ref: [tile, P]      (lane-dense padded output; real columns are exact)
    """
    num_layers = w_ref.shape[0]           # static at trace time
    in_w = x_ref.shape[1]

    h = x_ref[...].astype(jnp.float32)
    # First layer contracts over the true input width (small K); the zero
    # weight rows/cols of later layers annihilate the sigmoid(0)=0.5 values
    # that padded activation lanes pick up, so real lanes stay exact.
    h = jnp.dot(h, w_ref[0, :in_w, :], preferred_element_type=jnp.float32)
    h = h + b_ref[0:1, :]
    for l in range(1, num_layers):
        # sigmoid(x) = 0.5*tanh(0.5*x)+0.5 : single EUP transcendental + VPU fma.
        h = 0.5 * jnp.tanh(0.5 * h) + 0.5
        h = jnp.dot(h, w_ref[l], preferred_element_type=jnp.float32)
        h = h + b_ref[l:l + 1, :]
    o_ref[...] = h.astype(o_ref.dtype)


def pack_fnn_params(params):
    """One-time packing (hoisted out of the forward path).

    params: list of (W_pt [out, in], b [out]) in PyTorch layout.
    Returns (w_stack [L, P, P] in [in, out] layout, b_stack [L, P], out_size).
    """
    num_layers = len(params)
    in_size = params[0][0].shape[1]
    out_size = params[-1][0].shape[0]
    feat = max([in_size] + [w.shape[0] for w, _ in params])
    P = _round_up(feat, LANE)

    w_stack = jnp.zeros((num_layers, P, P), jnp.float32)
    b_stack = jnp.zeros((num_layers, P), jnp.float32)
    for l, (w, b) in enumerate(params):
        wt = jnp.asarray(w, jnp.float32).T                      # [in, out]
        w_stack = w_stack.at[l, :wt.shape[0], :wt.shape[1]].set(wt)
        b_stack = b_stack.at[l, :b.shape[0]].set(jnp.asarray(b, jnp.float32))
    return w_stack, b_stack, out_size


def fnn_forward_padded(x, w_stack, b_stack, *, batch_tile=None):
    """Fused MLP forward; returns the lane-padded [B_pad, P] output (no slice copy)."""
    B, in_size = x.shape
    num_layers, P, _ = w_stack.shape

    if batch_tile is None:
        batch_tile = _choose_batch_tile(B, _num_tensorcores())
    B_pad = _round_up(B, batch_tile)
    in_w = _round_up(in_size, SUBLANE)   # keep the first-weight slice sublane-aligned
    if B_pad != B or in_w != in_size:
        # Only pad when needed (not hit in the demo); features never padded to 128.
        x = jnp.zeros((B_pad, in_w), x.dtype).at[:B, :in_size].set(x)

    grid = (B_pad // batch_tile,)
    return pl.pallas_call(
        _fnn_kernel,
        out_shape=jax.ShapeDtypeStruct((B_pad, P), x.dtype),
        grid_spec=pltpu.PrefetchScalarGridSpec(
            num_scalar_prefetch=0,
            grid=grid,
            in_specs=[
                # x: batch-tiled; feature dim equals the full array dim, so it is
                # a legal (non-128) block width and needs no HBM padding pass.
                pl.BlockSpec((batch_tile, in_w), lambda i: (i, 0)),
                # Grid-invariant weights / biases (constant index_map => DMA'd once).
                pl.BlockSpec((num_layers, P, P), lambda i: (0, 0, 0)),
                pl.BlockSpec((num_layers, P), lambda i: (0, 0)),
            ],
            out_specs=pl.BlockSpec((batch_tile, P), lambda i: (i, 0)),
        ),
        compiler_params=pltpu.CompilerParams(
            dimension_semantics=("parallel",)),
    )(x, w_stack, b_stack)


@functools.partial(jax.jit, static_argnames=("out_size", "batch_tile"))
def fnn_forward(x, w_stack, b_stack, *, out_size, batch_tile=None):
    """Convenience wrapper returning the logical [B, out_size] output.

    Consumers that can accept the lane-padded slab should call
    fnn_forward_padded directly and skip this slice.
    """
    out_pad = fnn_forward_padded(x, w_stack, b_stack, batch_tile=batch_tile)
    return out_pad[:x.shape[0], :out_size]


def init_fnn_params(key, sizes):
    """PyTorch nn.Linear-style init: U(-1/sqrt(fan_in), 1/sqrt(fan_in))."""
    params = []
    for fan_in, fan_out in zip(sizes[:-1], sizes[1:]):
        key, kw, kb = jax.random.split(key, 3)
        bound = 1.0 / jnp.sqrt(fan_in)
        w = jax.random.uniform(kw, (fan_out, fan_in), jnp.float32, -bound, bound)
        b = jax.random.uniform(kb, (fan_out,), jnp.float32, -bound, bound)
        params.append((w, b))
    return params


def fnn_reference(x, params):
    h = x
    n = len(params)
    for idx, (w, b) in enumerate(params):
        h = h @ w.T + b
        if idx < n - 1:
            h = 1.0 / (1.0 + jnp.exp(-h))
    return h


if __name__ == "__main__":
    # FNN(input_size=32, hidden1=64, hidden2=64, hidden3=32, hidden4=32, output_size=16)
    sizes = (32, 64, 64, 32, 32, 16)
    batch = 256

    key = jax.random.PRNGKey(0)
    key, kx = jax.random.split(key)
    x = jax.random.normal(kx, (batch, sizes[0]), jnp.float32)
    params = init_fnn_params(key, sizes)

    # One-time packing, done outside the per-call forward path.
    w_stack, b_stack, out_size = pack_fnn_params(params)
    w_stack = w_stack.block_until_ready()
    b_stack = b_stack.block_until_ready()

    out = fnn_forward(x, w_stack, b_stack, out_size=out_size)
    out = jax.block_until_ready(out)

    ref = fnn_reference(x, params)
    assert out.shape == (batch, sizes[-1])
    assert jnp.allclose(out, ref, atol=1e-5, rtol=1e-5), "mismatch vs reference"

    print("KERNEL_OK")
</pallas_src>

<mosaic_0001>
module attributes {stable_mosaic.version = 11 : i64} {
  func.func @_fnn_kernel(%arg0: i32, %arg1: memref<256x32xf32, #tpu.memory_space<vmem>>, %arg2: memref<5x128x128xf32, #tpu.memory_space<vmem>>, %arg3: memref<5x128xf32, #tpu.memory_space<vmem>>, %arg4: memref<256x128xf32, #tpu.memory_space<vmem>>) attributes {dimension_semantics = [#tpu.dimension_semantics<parallel>], iteration_bounds = array<i64: 1>, scalar_prefetch = 0 : i64, scratch_operands = 0 : i64, tpu.core_type = #tpu.core_type<tc>, window_params = [{transform_indices = @transform_0, window_bounds = array<i64: 256, 32>}, {pipeline_mode = #tpu.pipeline_mode<synchronous>, transform_indices = @transform_1, window_bounds = array<i64: 5, 128, 128>}, {pipeline_mode = #tpu.pipeline_mode<synchronous>, transform_indices = @transform_2, window_bounds = array<i64: 5, 128>}, {transform_indices = @transform_3, window_bounds = array<i64: 256, 128>}]} {
    %c0 = arith.constant 0 : index
    %c0_0 = arith.constant 0 : index
    %0 = vector.load %arg1[%c0, %c0_0] : memref<256x32xf32, #tpu.memory_space<vmem>>, vector<256x32xf32>
    %c0_1 = arith.constant 0 : index
    %c0_2 = arith.constant 0 : index
    %c0_3 = arith.constant 0 : index
    %1 = vector.load %arg2[%c0_1, %c0_2, %c0_3] : memref<5x128x128xf32, #tpu.memory_space<vmem>>, vector<1x32x128xf32>
    %2 = vector.shape_cast %1 : vector<1x32x128xf32> to vector<32x128xf32>
    %cst = arith.constant dense<0.000000e+00> : vector<256x128xf32>
    %3 = tpu.matmul %0, %2, %cst {dimension_numbers = #tpu.dot_dimension_numbers<[1], [0], [0], [1], [0, 0, 1, 1], [], []>} : vector<256x32xf32>, vector<32x128xf32>, vector<256x128xf32> -> vector<256x128xf32>
    %c0_4 = arith.constant 0 : index
    %c0_5 = arith.constant 0 : index
    %4 = vector.load %arg3[%c0_4, %c0_5] : memref<5x128xf32, #tpu.memory_space<vmem>>, vector<1x128xf32>
    %5 = vector.broadcast %4 : vector<1x128xf32> to vector<256x128xf32>
    %6 = arith.addf %3, %5 : vector<256x128xf32>
    %cst_6 = arith.constant 5.000000e-01 : f32
    %7 = vector.broadcast %cst_6 : f32 to vector<256x128xf32>
    %8 = arith.mulf %7, %6 : vector<256x128xf32>
    %9 = math.tanh %8 : vector<256x128xf32>
    %cst_7 = arith.constant 5.000000e-01 : f32
    %10 = vector.broadcast %cst_7 : f32 to vector<256x128xf32>
    %11 = arith.mulf %10, %9 : vector<256x128xf32>
    %cst_8 = arith.constant 5.000000e-01 : f32
    %12 = vector.broadcast %cst_8 : f32 to vector<256x128xf32>
    %13 = arith.addf %11, %12 : vector<256x128xf32>
    %c1 = arith.constant 1 : index
    %c0_9 = arith.constant 0 : index
    %c0_10 = arith.constant 0 : index
    %14 = vector.load %arg2[%c1, %c0_9, %c0_10] : memref<5x128x128xf32, #tpu.memory_space<vmem>>, vector<1x128x128xf32>
    %15 = vector.shape_cast %14 : vector<1x128x128xf32> to vector<128x128xf32>
    %cst_11 = arith.constant dense<0.000000e+00> : vector<256x128xf32>
    %16 = tpu.matmul %13, %15, %cst_11 {dimension_numbers = #tpu.dot_dimension_numbers<[1], [0], [0], [1], [0, 0, 1, 1], [], []>} : vector<256x128xf32>, vector<128x128xf32>, vector<256x128xf32> -> vector<256x128xf32>
    %c1_12 = arith.constant 1 : index
    %c0_13 = arith.constant 0 : index
    %17 = vector.load %arg3[%c1_12, %c0_13] : memref<5x128xf32, #tpu.memory_space<vmem>>, vector<1x128xf32>
    %18 = vector.broadcast %17 : vector<1x128xf32> to vector<256x128xf32>
    %19 = arith.addf %16, %18 : vector<256x128xf32>
    %cst_14 = arith.constant 5.000000e-01 : f32
    %20 = vector.broadcast %cst_14 : f32 to vector<256x128xf32>
    %21 = arith.mulf %20, %19 : vector<256x128xf32>
    %22 = math.tanh %21 : vector<256x128xf32>
    %cst_15 = arith.constant 5.000000e-01 : f32
    %23 = vector.broadcast %cst_15 : f32 to vector<256x128xf32>
    %24 = arith.mulf %23, %22 : vector<256x128xf32>
    %cst_16 = arith.constant 5.000000e-01 : f32
    %25 = vector.broadcast %cst_16 : f32 to vector<256x128xf32>
    %26 = arith.addf %24, %25 : vector<256x128xf32>
    %c2 = arith.constant 2 : index
    %c0_17 = arith.constant 0 : index
    %c0_18 = arith.constant 0 : index
    %27 = vector.load %arg2[%c2, %c0_17, %c0_18] : memref<5x128x128xf32, #tpu.memory_space<vmem>>, vector<1x128x128xf32>
    %28 = vector.shape_cast %27 : vector<1x128x128xf32> to vector<128x128xf32>
    %cst_19 = arith.constant dense<0.000000e+00> : vector<256x128xf32>
    %29 = tpu.matmul %26, %28, %cst_19 {dimension_numbers = #tpu.dot_dimension_numbers<[1], [0], [0], [1], [0, 0, 1, 1], [], []>} : vector<256x128xf32>, vector<128x128xf32>, vector<256x128xf32> -> vector<256x128xf32>
    %c2_20 = arith.constant 2 : index
    %c0_21 = arith.constant 0 : index
    %30 = vector.load %arg3[%c2_20, %c0_21] : memref<5x128xf32, #tpu.memory_space<vmem>>, vector<1x128xf32>
    %31 = vector.broadcast %30 : vector<1x128xf32> to vector<256x128xf32>
    %32 = arith.addf %29, %31 : vector<256x128xf32>
    %cst_22 = arith.constant 5.000000e-01 : f32
    %33 = vector.broadcast %cst_22 : f32 to vector<256x128xf32>
    %34 = arith.mulf %33, %32 : vector<256x128xf32>
    %35 = math.tanh %34 : vector<256x128xf32>
    %cst_23 = arith.constant 5.000000e-01 : f32
    %36 = vector.broadcast %cst_23 : f32 to vector<256x128xf32>
    %37 = arith.mulf %36, %35 : vector<256x128xf32>
    %cst_24 = arith.constant 5.000000e-01 : f32
    %38 = vector.broadcast %cst_24 : f32 to vector<256x128xf32>
    %39 = arith.addf %37, %38 : vector<256x128xf32>
    %c3 = arith.constant 3 : index
    %c0_25 = arith.constant 0 : index
    %c0_26 = arith.constant 0 : index
    %40 = vector.load %arg2[%c3, %c0_25, %c0_26] : memref<5x128x128xf32, #tpu.memory_space<vmem>>, vector<1x128x128xf32>
    %41 = vector.shape_cast %40 : vector<1x128x128xf32> to vector<128x128xf32>
    %cst_27 = arith.constant dense<0.000000e+00> : vector<256x128xf32>
    %42 = tpu.matmul %39, %41, %cst_27 {dimension_numbers = #tpu.dot_dimension_numbers<[1], [0], [0], [1], [0, 0, 1, 1], [], []>} : vector<256x128xf32>, vector<128x128xf32>, vector<256x128xf32> -> vector<256x128xf32>
    %c3_28 = arith.constant 3 : index
    %c0_29 = arith.constant 0 : index
    %43 = vector.load %arg3[%c3_28, %c0_29] : memref<5x128xf32, #tpu.memory_space<vmem>>, vector<1x128xf32>
    %44 = vector.broadcast %43 : vector<1x128xf32> to vector<256x128xf32>
    %45 = arith.addf %42, %44 : vector<256x128xf32>
    %cst_30 = arith.constant 5.000000e-01 : f32
    %46 = vector.broadcast %cst_30 : f32 to vector<256x128xf32>
    %47 = arith.mulf %46, %45 : vector<256x128xf32>
    %48 = math.tanh %47 : vector<256x128xf32>
    %cst_31 = arith.constant 5.000000e-01 : f32
    %49 = vector.broadcast %cst_31 : f32 to vector<256x128xf32>
    %50 = arith.mulf %49, %48 : vector<256x128xf32>
    %cst_32 = arith.constant 5.000000e-01 : f32
    %51 = vector.broadcast %cst_32 : f32 to vector<256x128xf32>
    %52 = arith.addf %50, %51 : vector<256x128xf32>
    %c4 = arith.constant 4 : index
    %c0_33 = arith.constant 0 : index
    %c0_34 = arith.constant 0 : index
    %53 = vector.load %arg2[%c4, %c0_33, %c0_34] : memref<5x128x128xf32, #tpu.memory_space<vmem>>, vector<1x128x128xf32>
    %54 = vector.shape_cast %53 : vector<1x128x128xf32> to vector<128x128xf32>
    %cst_35 = arith.constant dense<0.000000e+00> : vector<256x128xf32>
    %55 = tpu.matmul %52, %54, %cst_35 {dimension_numbers = #tpu.dot_dimension_numbers<[1], [0], [0], [1], [0, 0, 1, 1], [], []>} : vector<256x128xf32>, vector<128x128xf32>, vector<256x128xf32> -> vector<256x128xf32>
    %c4_36 = arith.constant 4 : index
    %c0_37 = arith.constant 0 : index
    %56 = vector.load %arg3[%c4_36, %c0_37] : memref<5x128xf32, #tpu.memory_space<vmem>>, vector<1x128xf32>
    %57 = vector.broadcast %56 : vector<1x128xf32> to vector<256x128xf32>
    %58 = arith.addf %55, %57 : vector<256x128xf32>
    %c0_38 = arith.constant 0 : index
    %c0_39 = arith.constant 0 : index
    %59 = vector.load %arg4[%c0_38, %c0_39] : memref<256x128xf32, #tpu.memory_space<vmem>>, vector<256x128xf32>
    tpu.vector_store %arg4[%c0_38, %c0_39], %58 {strides = array<i32>} : memref<256x128xf32, #tpu.memory_space<vmem>>, vector<256x128xf32>,
    return
  }
  func.func @transform_0(%arg0: i32) -> (i32, i32) {
    %c0_i32 = arith.constant 0 : i32
    %c0_i32_0 = arith.constant 0 : i32
    return %arg0, %c0_i32 : i32, i32
  }
  func.func @transform_1(%arg0: i32) -> (i32, i32, i32) {
    %c0_i32 = arith.constant 0 : i32
    %c0_i32_0 = arith.constant 0 : i32
    %c0_i32_1 = arith.constant 0 : i32
    %c0_i32_2 = arith.constant 0 : i32
    return %c0_i32, %c0_i32_0, %c0_i32_1 : i32, i32, i32
  }
  func.func @transform_2(%arg0: i32) -> (i32, i32) {
    %c0_i32 = arith.constant 0 : i32
    %c0_i32_0 = arith.constant 0 : i32
    %c0_i32_1 = arith.constant 0 : i32
    return %c0_i32, %c0_i32_0 : i32, i32
  }
  func.func @transform_3(%arg0: i32) -> (i32, i32) {
    %c0_i32 = arith.constant 0 : i32
    %c0_i32_0 = arith.constant 0 : i32
    return %arg0, %c0_i32 : i32, i32
  }
}

</mosaic_0001>

<llo_original>
// kernel: fnn_forward.1
$region0: #{fnn_forward.1}
  #allocation0 [shape = 'u32[]', space=smem, size = 0x4, offset = 0x4, fixed_abs, tag = 'smem constant byte address 0x4 - core index']
  #allocation1 [shape = 'u32[144,128]{1,0:T(1,128)}', space=vmem, size = 0x12000, scoped, tag = 'internal scratch']
  %s0 = inlined_call_operand.vmem [shape: f32[256,32], index: 0, kind: input, shape index: {}]
  %s1 = inlined_call_operand.hbm [shape: f32[5,128,128], index: 1, kind: input, shape index: {}]
  %s2 = inlined_call_operand.vmem [shape: f32[5,128], index: 2, kind: input, shape index: {}]
  %s3 = inlined_call_operand.vmem [shape: f32[256,128], index: 3, kind: output, shape index: {}]
  %s4 = sld [smem:[#allocation0]]
  $region26: #{fnn_forward.1} parent=0
    _
  %s6 = ssub.s32 1, %s4
  %s7 = scalar_select 0, %s6, %s4
  $region1: #{fnn_forward.1} parent=0
    #allocation2 [shape = 'u8[327680]{0}', space=vmem, size = 0x50000, scoped, tag = 'input window, operand 1, single buffered']
    #allocation3 [shape = 's32[1]{0}', space=sflag, size = 0x4, scoped, tag = 'scoped memory for fnn_forward.1']
    %8 = vsyncpa [#allocation3], 0
    // Predicated region
    $region2: #{fnn_forward.1} parent=1 // pred_check
      _
    $region3: #{fnn_forward.1} parent=1 // pred_check_branch
      %10 = sbr.rel (0) target = $region5
    $region4: #{fnn_forward.1} parent=1 // pred_region
      _
    $region5: #{fnn_forward.1} parent=1 // pred_fallthru
      _
    // Predicated region
    $region6: #{fnn_forward.1} parent=1 // pred_check
      _
    $region7: #{fnn_forward.1} parent=1 // pred_check_branch
      %12 = sbr.rel (0) target = $region9
    $region8: #{fnn_forward.1} parent=1 // pred_region
      %s14 = ssub.s32 10240, 10240
      %15 = vsyncadd [#allocation3], %s14
      %s16 = sshll.u32 [#allocation2], 4
      %s17 = int_to_ptr.vmem [resolvable:$true] %s16
      %22 = dma.hbm_to_vmem [thread:$0]  %s1, 10240, %s17, [#allocation3], 128, 128, 8
    $region9: #{fnn_forward.1} parent=1 // pred_fallthru
      _
    // Predicated region
    $region10: #{fnn_forward.1} parent=1 // pred_check
      _
    $region11: #{fnn_forward.1} parent=1 // pred_check_branch
      %24 = sbr.rel (0) target = $region13
    $region12: #{fnn_forward.1} parent=1 // pred_region
      _
    $region13: #{fnn_forward.1} parent=1 // pred_fallthru
      _
    // Predicated region
    $region14: #{fnn_forward.1} parent=1 // pred_check
      _
    $region15: #{fnn_forward.1} parent=1 // pred_check_branch
      %26 = sbr.rel (0) target = $region17
    $region16: #{fnn_forward.1} parent=1 // pred_region
      %27 = dma.done [#allocation3], 10240
    $region17: #{fnn_forward.1} parent=1 // pred_fallthru
      _
    %v28 = vld [vmem:[%s0] sm:$0xff]
    %v29 = vld [vmem:[%s0 + $0x8] sm:$0xff]
    %v30 = vld [vmem:[%s0 + $0x10] sm:$0xff]
    %v31 = vld [vmem:[%s0 + $0x18] sm:$0xff]
    %v32 = vld [vmem:[%s0 + $0x20] sm:$0xff]
    %v33 = vld [vmem:[%s0 + $0x28] sm:$0xff]
    %v34 = vld [vmem:[%s0 + $0x30] sm:$0xff]
    %v35 = vld [vmem:[%s0 + $0x38] sm:$0xff]
    %v36 = vld [vmem:[%s0 + $0x40] sm:$0xff]
    %v37 = vld [vmem:[%s0 + $0x48] sm:$0xff]
    %v38 = vld [vmem:[%s0 + $0x50] sm:$0xff]
    %v39 = vld [vmem:[%s0 + $0x58] sm:$0xff]
    %v40 = vld [vmem:[%s0 + $0x60] sm:$0xff]
    %v41 = vld [vmem:[%s0 + $0x68] sm:$0xff]
    %v42 = vld [vmem:[%s0 + $0x70] sm:$0xff]
    %v43 = vld [vmem:[%s0 + $0x78] sm:$0xff]
    %v44 = vld [vmem:[%s0 + $0x80] sm:$0xff]
    %v45 = vld [vmem:[%s0 + $0x88] sm:$0xff]
    %v46 = vld [vmem:[%s0 + $0x90] sm:$0xff]
    %v47 = vld [vmem:[%s0 + $0x98] sm:$0xff]
    %v48 = vld [vmem:[%s0 + $0xa0] sm:$0xff]
    %v49 = vld [vmem:[%s0 + $0xa8] sm:$0xff]
    %v50 = vld [vmem:[%s0 + $0xb0] sm:$0xff]
    %v51 = vld [vmem:[%s0 + $0xb8] sm:$0xff]
    %v52 = vld [vmem:[%s0 + $0xc0] sm:$0xff]
    %v53 = vld [vmem:[%s0 + $0xc8] sm:$0xff]
    %v54 = vld [vmem:[%s0 + $0xd0] sm:$0xff]
    %v55 = vld [vmem:[%s0 + $0xd8] sm:$0xff]
    %v56 = vld [vmem:[%s0 + $0xe0] sm:$0xff]
    %v57 = vld [vmem:[%s0 + $0xe8] sm:$0xff]
    %v58 = vld [vmem:[%s0 + $0xf0] sm:$0xff]
    %v59 = vld [vmem:[%s0 + $0xf8] sm:$0xff]
    %v60 = vld [vmem:[#allocation2] sm:$0xff]
    %v61 = vld [vmem:[#allocation2 + $0x8] sm:$0xff]
    %v62 = vld [vmem:[#allocation2 + $0x10] sm:$0xff]
    %v63 = vld [vmem:[#allocation2 + $0x18] sm:$0xff]
    %v64 = vld [vmem:[%s2] sm:$0x1]
    %v65 = vlaneseq
    %v66 = vshrl.u32 %v65, 7
    %v67 = vsub.s32 0, %v66
    %v68 = vrot.slane %v64, %v67
    %vm69 = vcmask 261120
    %v71 = vsel %vm69, %v28, 0
    %v74 = vsel %vm69, %v29, 0
    %v77 = vsel %vm69, %v30, 0
    %v80 = vsel %vm69, %v31, 0
    %v83 = vsel %vm69, %v32, 0
    %v86 = vsel %vm69, %v33, 0
    %v89 = vsel %vm69, %v34, 0
    %v92 = vsel %vm69, %v35, 0
    %v95 = vsel %vm69, %v36, 0
    %v98 = vsel %vm69, %v37, 0
    %v101 = vsel %vm69, %v38, 0
    %v104 = vsel %vm69, %v39, 0
    %v107 = vsel %vm69, %v40, 0
    %v110 = vsel %vm69, %v41, 0
    %v113 = vsel %vm69, %v42, 0
    %v116 = vsel %vm69, %v43, 0
    %v119 = vsel %vm69, %v44, 0
    %v122 = vsel %vm69, %v45, 0
    %v125 = vsel %vm69, %v46, 0
    %v128 = vsel %vm69, %v47, 0
    %v131 = vsel %vm69, %v48, 0
    %v134 = vsel %vm69, %v49, 0
    %v137 = vsel %vm69, %v50, 0
    %v140 = vsel %vm69, %v51, 0
    %v143 = vsel %vm69, %v52, 0
    %v146 = vsel %vm69, %v53, 0
    %v149 = vsel %vm69, %v54, 0
    %v152 = vsel %vm69, %v55, 0
    %v155 = vsel %vm69, %v56, 0
    %v158 = vsel %vm69, %v57, 0
    %v161 = vsel %vm69, %v58, 0
    %v164 = vsel %vm69, %v59, 0
    %166 = vmatprep.subr.mxu0 0.0
    %167 = vmatpush1.msra.mxu0 0.0
    %168 = vmatprep.subr.mxu0 0.0
    %169 = vmatpush1.msra.mxu0 0.0
    %170 = vmatprep.subr.mxu0 0.0
    %171 = vmatpush1.msra.mxu0 0.0
    %172 = vmatprep.subr.mxu0 0.0
    %173 = vmatpush1.msra.mxu0 0.0
    %174 = vmatprep.subr.mxu0 0.0
    %175 = vmatpush1.msra.mxu0 0.0
    %176 = vmatprep.subr.mxu0 0.0
    %177 = vmatpush1.msra.mxu0 0.0
    %178 = vmatprep.subr.mxu0 0.0
    %179 = vmatpush1.msra.mxu0 0.0
    %180 = vmatprep.subr.mxu0 0.0
    %181 = vmatpush1.msra.mxu0 0.0
    %182 = vmatprep.subr.mxu0 0.0
    %183 = vmatpush1.msra.mxu0 0.0
    %184 = vmatprep.subr.mxu0 0.0
    %185 = vmatpush1.msra.mxu0 0.0
    %186 = vmatprep.subr.mxu0 0.0
    %187 = vmatpush1.msra.mxu0 0.0
    %188 = vmatprep.subr.mxu0 0.0
    %189 = vmatpush1.msra.mxu0 0.0
    %190 = vmatprep.subr.mxu0 0.0
    %191 = vmatpush1.msra.mxu0 %v63
    %192 = vmatprep.subr.mxu0 0.0
    %193 = vmatpush1.msra.mxu0 %v62
    %194 = vmatprep.subr.mxu0 0.0
    %195 = vmatpush1.msra.mxu0 %v61
    %196 = vmatprep.subr.mxu0 0.0
    %197 = vmatpush1.msra.mxu0 %v60
    %198 = vmatprep.subr.mxu0 0.0
    %199 = vmatpush2.msra.mxu0 0.0
    %200 = vmatprep.subr.mxu0 0.0
    %201 = vmatpush2.msra.mxu0 0.0
    %202 = vmatprep.subr.mxu0 0.0
    %203 = vmatpush2.msra.mxu0 0.0
    %204 = vmatprep.subr.mxu0 0.0
    %205 = vmatpush2.msra.mxu0 0.0
    %206 = vmatprep.subr.mxu0 0.0
    %207 = vmatpush2.msra.mxu0 0.0
    %208 = vmatprep.subr.mxu0 0.0
    %209 = vmatpush2.msra.mxu0 0.0
    %210 = vmatprep.subr.mxu0 0.0
    %211 = vmatpush2.msra.mxu0 0.0
    %212 = vmatprep.subr.mxu0 0.0
    %213 = vmatpush2.msra.mxu0 0.0
    %214 = vmatprep.subr.mxu0 0.0
    %215 = vmatpush2.msra.mxu0 0.0
    %216 = vmatprep.subr.mxu0 0.0
    %217 = vmatpush2.msra.mxu0 0.0
    %218 = vmatprep.subr.mxu0 0.0
    %219 = vmatpush2.msra.mxu0 0.0
    %220 = vmatprep.subr.mxu0 0.0
    %221 = vmatpush2.msra.mxu0 0.0
    %222 = vmatprep.subr.mxu0 0.0
    %223 = vmatpush2.msra.mxu0 0.0
    %224 = vmatprep.subr.mxu0 0.0
    %225 = vmatpush2.msra.mxu0 0.0
    %226 = vmatprep.subr.mxu0 0.0
    %227 = vmatpush2.msra.mxu0 0.0
    %228 = vmatprep.subr.mxu0 0.0
    %229 = vmatpush2.msra.mxu0 0.0
    %230 = vmatprep.mubr.f32.mxu0 0.0
    %231 = vmatmul.mubr.f32.gmra.mxu0 %v71
    %v232 = vpop.f32.mrf.mxu0
    %v233 = vadd.f32 %v68, %v232
    %v234 = vpop.f32.mrf.mxu0
    %235 = vmatprep.mubr.f32.mxu0 0.0
    %236 = vmatmul.mubr.f32.gmra.mxu0 %v74
    %v237 = vpop.f32.mrf.mxu0
    %v238 = vadd.f32 %v68, %v237
    %v239 = vpop.f32.mrf.mxu0
    %240 = vmatprep.mubr.f32.mxu0 0.0
    %241 = vmatmul.mubr.f32.gmra.mxu0 %v77
    %v242 = vpop.f32.mrf.mxu0
    %v243 = vadd.f32 %v68, %v242
    %v244 = vpop.f32.mrf.mxu0
    %245 = vmatprep.mubr.f32.mxu0 0.0
    %246 = vmatmul.mubr.f32.gmra.mxu0 %v80
    %v247 = vpop.f32.mrf.mxu0
    %v248 = vadd.f32 %v68, %v247
    %v249 = vpop.f32.mrf.mxu0
    %250 = vmatprep.mubr.f32.mxu0 0.0
    %251 = vmatmul.mubr.f32.gmra.mxu0 %v83
    %v252 = vpop.f32.mrf.mxu0
    %v253 = vadd.f32 %v68, %v252
    %v254 = vpop.f32.mrf.mxu0
    %255 = vmatprep.mubr.f32.mxu0 0.0
    %256 = vmatmul.mubr.f32.gmra.mxu0 %v86
    %v257 = vpop.f32.mrf.mxu0
    %v258 = vadd.f32 %v68, %v257
    %v259 = vpop.f32.mrf.mxu0
    %260 = vmatprep.mubr.f32.mxu0 0.0
    %261 = vmatmul.mubr.f32.gmra.mxu0 %v89
    %v262 = vpop.f32.mrf.mxu0
    %v263 = vadd.f32 %v68, %v262
    %v264 = vpop.f32.mrf.mxu0
    %265 = vmatprep.mubr.f32.mxu0 0.0
    %266 = vmatmul.mubr.f32.gmra.mxu0 %v92
    %v267 = vpop.f32.mrf.mxu0
    %v268 = vadd.f32 %v68, %v267
    %v269 = vpop.f32.mrf.mxu0
    %270 = vmatprep.mubr.f32.mxu0 0.0
    %271 = vmatmul.mubr.f32.gmra.mxu0 %v95
    %v272 = vpop.f32.mrf.mxu0
    %v273 = vadd.f32 %v68, %v272
    %v274 = vpop.f32.mrf.mxu0
    %275 = vmatprep.mubr.f32.mxu0 0.0
    %276 = vmatmul.mubr.f32.gmra.mxu0 %v98
    %v277 = vpop.f32.mrf.mxu0
    %v278 = vadd.f32 %v68, %v277
    %v279 = vpop.f32.mrf.mxu0
    %280 = vmatprep.mubr.f32.mxu0 0.0
    %281 = vmatmul.mubr.f32.gmra.mxu0 %v101
    %v282 = vpop.f32.mrf.mxu0
    %v283 = vadd.f32 %v68, %v282
    %v284 = vpop.f32.mrf.mxu0
    %285 = vmatprep.mubr.f32.mxu0 0.0
    %286 = vmatmul.mubr.f32.gmra.mxu0 %v104
    %v287 = vpop.f32.mrf.mxu0
    %v288 = vadd.f32 %v68, %v287
    %v289 = vpop.f32.mrf.mxu0
    %290 = vmatprep.mubr.f32.mxu0 0.0
    %291 = vmatmul.mubr.f32.gmra.mxu0 %v107
    %v292 = vpop.f32.mrf.mxu0
    %v293 = vadd.f32 %v68, %v292
    %v294 = vpop.f32.mrf.mxu0
    %295 = vmatprep.mubr.f32.mxu0 0.0
    %296 = vmatmul.mubr.f32.gmra.mxu0 %v110
    %v297 = vpop.f32.mrf.mxu0
    %v298 = vadd.f32 %v68, %v297
    %v299 = vpop.f32.mrf.mxu0
    %300 = vmatprep.mubr.f32.mxu0 0.0
    %301 = vmatmul.mubr.f32.gmra.mxu0 %v113
    %v302 = vpop.f32.mrf.mxu0
    %v303 = vadd.f32 %v68, %v302
    %v304 = vpop.f32.mrf.mxu0
    %305 = vmatprep.mubr.f32.mxu0 0.0
    %306 = vmatmul.mubr.f32.gmra.mxu0 %v116
    %v307 = vpop.f32.mrf.mxu0
    %v308 = vadd.f32 %v68, %v307
    %v309 = vpop.f32.mrf.mxu0
    %310 = vmatprep.mubr.f32.mxu0 0.0
    %311 = vmatmul.mubr.f32.gmra.mxu0 %v119
    %v312 = vpop.f32.mrf.mxu0
    %v313 = vadd.f32 %v68, %v312
    %v314 = vpop.f32.mrf.mxu0
    %315 = vmatprep.mubr.f32.mxu0 0.0
    %316 = vmatmul.mubr.f32.gmra.mxu0 %v122
    %v317 = vpop.f32.mrf.mxu0
    %v318 = vadd.f32 %v68, %v317
    %v319 = vpop.f32.mrf.mxu0
    %320 = vmatprep.mubr.f32.mxu0 0.0
    %321 = vmatmul.mubr.f32.gmra.mxu0 %v125
    %v322 = vpop.f32.mrf.mxu0
    %v323 = vadd.f32 %v68, %v322
    %v324 = vpop.f32.mrf.mxu0
    %325 = vmatprep.mubr.f32.mxu0 0.0
    %326 = vmatmul.mubr.f32.gmra.mxu0 %v128
    %v327 = vpop.f32.mrf.mxu0
    %v328 = vadd.f32 %v68, %v327
    %v329 = vpop.f32.mrf.mxu0
    %330 = vmatprep.mubr.f32.mxu0 0.0
    %331 = vmatmul.mubr.f32.gmra.mxu0 %v131
    %v332 = vpop.f32.mrf.mxu0
    %v333 = vadd.f32 %v68, %v332
    %v334 = vpop.f32.mrf.mxu0
    %335 = vmatprep.mubr.f32.mxu0 0.0
    %336 = vmatmul.mubr.f32.gmra.mxu0 %v134
    %v337 = vpop.f32.mrf.mxu0
    %v338 = vadd.f32 %v68, %v337
    %v339 = vpop.f32.mrf.mxu0
    %340 = vmatprep.mubr.f32.mxu0 0.0
    %341 = vmatmul.mubr.f32.gmra.mxu0 %v137
    %v342 = vpop.f32.mrf.mxu0
    %v343 = vadd.f32 %v68, %v342
    %v344 = vpop.f32.mrf.mxu0
    %345 = vmatprep.mubr.f32.mxu0 0.0
    %346 = vmatmul.mubr.f32.gmra.mxu0 %v140
    %v347 = vpop.f32.mrf.mxu0
    %v348 = vadd.f32 %v68, %v347
    %v349 = vpop.f32.mrf.mxu0
    %350 = vmatprep.mubr.f32.mxu0 0.0
    %351 = vmatmul.mubr.f32.gmra.mxu0 %v143
    %v352 = vpop.f32.mrf.mxu0
    %v353 = vadd.f32 %v68, %v352
    %v354 = vpop.f32.mrf.mxu0
    %355 = vmatprep.mubr.f32.mxu0 0.0
    %356 = vmatmul.mubr.f32.gmra.mxu0 %v146
    %v357 = vpop.f32.mrf.mxu0
    %v358 = vadd.f32 %v68, %v357
    %v359 = vpop.f32.mrf.mxu0
    %360 = vmatprep.mubr.f32.mxu0 0.0
    %361 = vmatmul.mubr.f32.gmra.mxu0 %v149
    %v362 = vpop.f32.mrf.mxu0
    %v363 = vadd.f32 %v68, %v362
    %v364 = vpop.f32.mrf.mxu0
    %365 = vmatprep.mubr.f32.mxu0 0.0
    %366 = vmatmul.mubr.f32.gmra.mxu0 %v152
    %v367 = vpop.f32.mrf.mxu0
    %v368 = vadd.f32 %v68, %v367
    %v369 = vpop.f32.mrf.mxu0
    %370 = vmatprep.mubr.f32.mxu0 0.0
    %371 = vmatmul.mubr.f32.gmra.mxu0 %v155
    %v372 = vpop.f32.mrf.mxu0
    %v373 = vadd.f32 %v68, %v372
    %v374 = vpop.f32.mrf.mxu0
    %375 = vmatprep.mubr.f32.mxu0 0.0
    %376 = vmatmul.mubr.f32.gmra.mxu0 %v158
    %v377 = vpop.f32.mrf.mxu0
    %v378 = vadd.f32 %v68, %v377
    %v379 = vpop.f32.mrf.mxu0
    %380 = vmatprep.mubr.f32.mxu0 0.0
    %381 = vmatmul.mubr.f32.gmra.mxu0 %v161
    %v382 = vpop.f32.mrf.mxu0
    %v383 = vadd.f32 %v68, %v382
    %v384 = vpop.f32.mrf.mxu0
    %385 = vmatprep.mubr.f32.mxu0 0.0
    %386 = vmatmul.mubr.f32.gmra.mxu0 %v164
    %v387 = vpop.f32.mrf.mxu0
    %v388 = vadd.f32 %v68, %v387
    %v389 = vpop.f32.mrf.mxu0
    %390 = vdwg.mxu0
    %v391 = vmul.f32 %v233, 0.5
    %v392 = vmul.f32 %v238, 0.5
    %v393 = vmul.f32 %v243, 0.5
    %v394 = vmul.f32 %v248, 0.5
    %v395 = vmul.f32 %v253, 0.5
    %v396 = vmul.f32 %v258, 0.5
    %v397 = vmul.f32 %v263, 0.5
    %v398 = vmul.f32 %v268, 0.5
    %v399 = vmul.f32 %v273, 0.5
    %v400 = vmul.f32 %v278, 0.5
    %v401 = vmul.f32 %v283, 0.5
    %v402 = vmul.f32 %v288, 0.5
    %v403 = vmul.f32 %v293, 0.5
    %v404 = vmul.f32 %v298, 0.5
    %v405 = vmul.f32 %v303, 0.5
    %v406 = vmul.f32 %v308, 0.5
    %v407 = vmul.f32 %v313, 0.5
    %v408 = vmul.f32 %v318, 0.5
    %v409 = vmul.f32 %v323, 0.5
    %v410 = vmul.f32 %v328, 0.5
    %v411 = vmul.f32 %v333, 0.5
    %v412 = vmul.f32 %v338, 0.5
    %v413 = vmul.f32 %v343, 0.5
    %v414 = vmul.f32 %v348, 0.5
    %v415 = vmul.f32 %v353, 0.5
    %v416 = vmul.f32 %v358, 0.5
    %v417 = vmul.f32 %v363, 0.5
    %v418 = vmul.f32 %v368, 0.5
    %v419 = vmul.f32 %v373, 0.5
    %v420 = vmul.f32 %v378, 0.5
    %v421 = vmul.f32 %v383, 0.5
    %v422 = vmul.f32 %v388, 0.5
    %v423 = vtanh.pop %v391
    %v424 = vtanh.pop %v392
    %v425 = vtanh.pop %v393
    %v426 = vtanh.pop %v394
    %v427 = vtanh.pop %v395
    %v428 = vtanh.pop %v396
    %v429 = vtanh.pop %v397
    %v430 = vtanh.pop %v398
    %v431 = vtanh.pop %v399
    %v432 = vtanh.pop %v400
    %v433 = vtanh.pop %v401
    %v434 = vtanh.pop %v402
    %v435 = vtanh.pop %v403
    %v436 = vtanh.pop %v404
    %v437 = vtanh.pop %v405
    %v438 = vtanh.pop %v406
    %v439 = vtanh.pop %v407
    %v440 = vtanh.pop %v408
    %v441 = vtanh.pop %v409
    %v442 = vtanh.pop %v410
    %v443 = vtanh.pop %v411
    %v444 = vtanh.pop %v412
    %v445 = vtanh.pop %v413
    %v446 = vtanh.pop %v414
    %v447 = vtanh.pop %v415
    %v448 = vtanh.pop %v416
    %v449 = vtanh.pop %v417
    %v450 = vtanh.pop %v418
    %v451 = vtanh.pop %v419
    %v452 = vtanh.pop %v420
    %v453 = vtanh.pop %v421
    %v454 = vtanh.pop %v422
    %v455 = vmul.f32 %v423, 0.5
    %v456 = vmul.f32 %v424, 0.5
    %v457 = vmul.f32 %v425, 0.5
    %v458 = vmul.f32 %v426, 0.5
    %v459 = vmul.f32 %v427, 0.5
    %v460 = vmul.f32 %v428, 0.5
    %v461 = vmul.f32 %v429, 0.5
    %v462 = vmul.f32 %v430, 0.5
    %v463 = vmul.f32 %v431, 0.5
    %v464 = vmul.f32 %v432, 0.5
    %v465 = vmul.f32 %v433, 0.5
    %v466 = vmul.f32 %v434, 0.5
    %v467 = vmul.f32 %v435, 0.5
    %v468 = vmul.f32 %v436, 0.5
    %v469 = vmul.f32 %v437, 0.5
    %v470 = vmul.f32 %v438, 0.5
    %v471 = vmul.f32 %v439, 0.5
    %v472 = vmul.f32 %v440, 0.5
    %v473 = vmul.f32 %v441, 0.5
    %v474 = vmul.f32 %v442, 0.5
    %v475 = vmul.f32 %v443, 0.5
    %v476 = vmul.f32 %v444, 0.5
    %v477 = vmul.f32 %v445, 0.5
    %v478 = vmul.f32 %v446, 0.5
    %v479 = vmul.f32 %v447, 0.5
    %v480 = vmul.f32 %v448, 0.5
    %v481 = vmul.f32 %v449, 0.5
    %v482 = vmul.f32 %v450, 0.5
    %v483 = vmul.f32 %v451, 0.5
    %v484 = vmul.f32 %v452, 0.5
    %v485 = vmul.f32 %v453, 0.5
    %v486 = vmul.f32 %v454, 0.5
    %v487 = vadd.f32 %v455, 0.5
    %v488 = vadd.f32 %v456, 0.5
    %v489 = vadd.f32 %v457, 0.5
    %v490 = vadd.f32 %v458, 0.5
    %v491 = vadd.f32 %v459, 0.5
    %v492 = vadd.f32 %v460, 0.5
    %v493 = vadd.f32 %v461, 0.5
    %v494 = vadd.f32 %v462, 0.5
    %v495 = vadd.f32 %v463, 0.5
    %v496 = vadd.f32 %v464, 0.5
    %v497 = vadd.f32 %v465, 0.5
    %v498 = vadd.f32 %v466, 0.5
    %v499 = vadd.f32 %v467, 0.5
    %v500 = vadd.f32 %v468, 0.5
    %v501 = vadd.f32 %v469, 0.5
    %v502 = vadd.f32 %v470, 0.5
    %v503 = vadd.f32 %v471, 0.5
    %v504 = vadd.f32 %v472, 0.5
    %v505 = vadd.f32 %v473, 0.5
    %v506 = vadd.f32 %v474, 0.5
    %v507 = vadd.f32 %v475, 0.5
    %v508 = vadd.f32 %v476, 0.5
    %v509 = vadd.f32 %v477, 0.5
    %v510 = vadd.f32 %v478, 0.5
    %v511 = vadd.f32 %v479, 0.5
    %v512 = vadd.f32 %v480, 0.5
    %v513 = vadd.f32 %v481, 0.5
    %v514 = vadd.f32 %v482, 0.5
    %v515 = vadd.f32 %v483, 0.5
    %v516 = vadd.f32 %v484, 0.5
    %v517 = vadd.f32 %v485, 0.5
    %v518 = vadd.f32 %v486, 0.5
    %s519 = scalar_lea.vmem [#allocation2], 128
    %v520 = vld [vmem:[%s519] sm:$0xff]
    %v521 = vld [vmem:[%s519 + $0x8] sm:$0xff]
    %v522 = vld [vmem:[%s519 + $0x10] sm:$0xff]
    %v523 = vld [vmem:[%s519 + $0x18] sm:$0xff]
    %v524 = vld [vmem:[%s519 + $0x20] sm:$0xff]
    %v525 = vld [vmem:[%s519 + $0x28] sm:$0xff]
    %v526 = vld [vmem:[%s519 + $0x30] sm:$0xff]
    %v527 = vld [vmem:[%s519 + $0x38] sm:$0xff]
    %v528 = vld [vmem:[%s519 + $0x40] sm:$0xff]
    %v529 = vld [vmem:[%s519 + $0x48] sm:$0xff]
    %v530 = vld [vmem:[%s519 + $0x50] sm:$0xff]
    %v531 = vld [vmem:[%s519 + $0x58] sm:$0xff]
    %v532 = vld [vmem:[%s519 + $0x60] sm:$0xff]
    %v533 = vld [vmem:[%s519 + $0x68] sm:$0xff]
    %v534 = vld [vmem:[%s519 + $0x70] sm:$0xff]
    %v535 = vld [vmem:[%s519 + $0x78] sm:$0xff]
    %v536 = vld [vmem:[%s2 + $0x1] sm:$0x1]
    %v537 = vlaneseq
    %v538 = vshrl.u32 %v537, 7
    %v539 = vsub.s32 0, %v538
    %v540 = vrot.slane %v536, %v539
    %541 = vmatprep.subr.mxu0 0.0
    %542 = vmatpush1.msra.mxu0 %v535
    %543 = vmatprep.subr.mxu0 0.0
    %544 = vmatpush1.msra.mxu0 %v534
    %545 = vmatprep.subr.mxu0 0.0
    %546 = vmatpush1.msra.mxu0 %v533
    %547 = vmatprep.subr.mxu0 0.0
    %548 = vmatpush1.msra.mxu0 %v532
    %549 = vmatprep.subr.mxu0 0.0
    %550 = vmatpush1.msra.mxu0 %v531
    %551 = vmatprep.subr.mxu0 0.0
    %552 = vmatpush1.msra.mxu0 %v530
    %553 = vmatprep.subr.mxu0 0.0
    %554 = vmatpush1.msra.mxu0 %v529
    %555 = vmatprep.subr.mxu0 0.0
    %556 = vmatpush1.msra.mxu0 %v528
    %557 = vmatprep.subr.mxu0 0.0
    %558 = vmatpush1.msra.mxu0 %v527
    %559 = vmatprep.subr.mxu0 0.0
    %560 = vmatpush1.msra.mxu0 %v526
    %561 = vmatprep.subr.mxu0 0.0
    %562 = vmatpush1.msra.mxu0 %v525
    %563 = vmatprep.subr.mxu0 0.0
    %564 = vmatpush1.msra.mxu0 %v524
    %565 = vmatprep.subr.mxu0 0.0
    %566 = vmatpush1.msra.mxu0 %v523
    %567 = vmatprep.subr.mxu0 0.0
    %568 = vmatpush1.msra.mxu0 %v522
    %569 = vmatprep.subr.mxu0 0.0
    %570 = vmatpush1.msra.mxu0 %v521
    %571 = vmatprep.subr.mxu0 0.0
    %572 = vmatpush1.msra.mxu0 %v520
    %573 = vmatprep.subr.mxu0 0.0
    %574 = vmatpush2.msra.mxu0 0.0
    %575 = vmatprep.subr.mxu0 0.0
    %576 = vmatpush2.msra.mxu0 0.0
    %577 = vmatprep.subr.mxu0 0.0
    %578 = vmatpush2.msra.mxu0 0.0
    %579 = vmatprep.subr.mxu0 0.0
    %580 = vmatpush2.msra.mxu0 0.0
    %581 = vmatprep.subr.mxu0 0.0
    %582 = vmatpush2.msra.mxu0 0.0
    %583 = vmatprep.subr.mxu0 0.0
    %584 = vmatpush2.msra.mxu0 0.0
    %585 = vmatprep.subr.mxu0 0.0
    %586 = vmatpush2.msra.mxu0 0.0
    %587 = vmatprep.subr.mxu0 0.0
    %588 = vmatpush2.msra.mxu0 0.0
    %589 = vmatprep.subr.mxu0 0.0
    %590 = vmatpush2.msra.mxu0 0.0
    %591 = vmatprep.subr.mxu0 0.0
    %592 = vmatpush2.msra.mxu0 0.0
    %593 = vmatprep.subr.mxu0 0.0
    %594 = vmatpush2.msra.mxu0 0.0
    %595 = vmatprep.subr.mxu0 0.0
    %596 = vmatpush2.msra.mxu0 0.0
    %597 = vmatprep.subr.mxu0 0.0
    %598 = vmatpush2.msra.mxu0 0.0
    %599 = vmatprep.subr.mxu0 0.0
    %600 = vmatpush2.msra.mxu0 0.0
    %601 = vmatprep.subr.mxu0 0.0
    %602 = vmatpush2.msra.mxu0 0.0
    %603 = vmatprep.subr.mxu0 0.0
    %604 = vmatpush2.msra.mxu0 0.0
    %605 = vmatprep.mubr.f32.mxu0 0.0
    %606 = vmatmul.mubr.f32.gmra.mxu0 %v487
    %v607 = vpop.f32.mrf.mxu0
    %v608 = vadd.f32 %v540, %v607
    %v609 = vpop.f32.mrf.mxu0
    %610 = vmatprep.mubr.f32.mxu0 0.0
    %611 = vmatmul.mubr.f32.gmra.mxu0 %v488
    %v612 = vpop.f32.mrf.mxu0
    %v613 = vadd.f32 %v540, %v612
    %v614 = vpop.f32.mrf.mxu0
    %615 = vmatprep.mubr.f32.mxu0 0.0
    %616 = vmatmul.mubr.f32.gmra.mxu0 %v489
    %v617 = vpop.f32.mrf.mxu0
    %v618 = vadd.f32 %v540, %v617
    %v619 = vpop.f32.mrf.mxu0
    %620 = vmatprep.mubr.f32.mxu0 0.0
    %621 = vmatmul.mubr.f32.gmra.mxu0 %v490
    %v622 = vpop.f32.mrf.mxu0
    %v623 = vadd.f32 %v540, %v622
    %v624 = vpop.f32.mrf.mxu0
    %625 = vmatprep.mubr.f32.mxu0 0.0
    %626 = vmatmul.mubr.f32.gmra.mxu0 %v491
    %v627 = vpop.f32.mrf.mxu0
    %v628 = vadd.f32 %v540, %v627
    %v629 = vpop.f32.mrf.mxu0
    %630 = vmatprep.mubr.f32.mxu0 0.0
    %631 = vmatmul.mubr.f32.gmra.mxu0 %v492
    %v632 = vpop.f32.mrf.mxu0
    %v633 = vadd.f32 %v540, %v632
    %v634 = vpop.f32.mrf.mxu0
    %635 = vmatprep.mubr.f32.mxu0 0.0
    %636 = vmatmul.mubr.f32.gmra.mxu0 %v493
    %v637 = vpop.f32.mrf.mxu0
    %v638 = vadd.f32 %v540, %v637
    %v639 = vpop.f32.mrf.mxu0
    %640 = vmatprep.mubr.f32.mxu0 0.0
    %641 = vmatmul.mubr.f32.gmra.mxu0 %v494
    %v642 = vpop.f32.mrf.mxu0
    %v643 = vadd.f32 %v540, %v642
    %v644 = vpop.f32.mrf.mxu0
    %645 = vmatprep.mubr.f32.mxu0 0.0
    %646 = vmatmul.mubr.f32.gmra.mxu0 %v495
    %v647 = vpop.f32.mrf.mxu0
    %v648 = vadd.f32 %v540, %v647
    %v649 = vpop.f32.mrf.mxu0
    %650 = vmatprep.mubr.f32.mxu0 0.0
    %651 = vmatmul.mubr.f32.gmra.mxu0 %v496
    %v652 = vpop.f32.mrf.mxu0
    %v653 = vadd.f32 %v540, %v652
    %v654 = vpop.f32.mrf.mxu0
    %655 = vmatprep.mubr.f32.mxu0 0.0
    %656 = vmatmul.mubr.f32.gmra.mxu0 %v497
    %v657 = vpop.f32.mrf.mxu0
    %v658 = vadd.f32 %v540, %v657
    %v659 = vpop.f32.mrf.mxu0
    %660 = vmatprep.mubr.f32.mxu0 0.0
    %661 = vmatmul.mubr.f32.gmra.mxu0 %v498
    %v662 = vpop.f32.mrf.mxu0
    %v663 = vadd.f32 %v540, %v662
    %v664 = vpop.f32.mrf.mxu0
    %665 = vmatprep.mubr.f32.mxu0 0.0
    %666 = vmatmul.mubr.f32.gmra.mxu0 %v499
    %v667 = vpop.f32.mrf.mxu0
    %v668 = vadd.f32 %v540, %v667
    %v669 = vpop.f32.mrf.mxu0
    %670 = vmatprep.mubr.f32.mxu0 0.0
    %671 = vmatmul.mubr.f32.gmra.mxu0 %v500
    %v672 = vpop.f32.mrf.mxu0
    %v673 = vadd.f32 %v540, %v672
    %v674 = vpop.f32.mrf.mxu0
    %675 = vmatprep.mubr.f32.mxu0 0.0
    %676 = vmatmul.mubr.f32.gmra.mxu0 %v501
    %v677 = vpop.f32.mrf.mxu0
    %v678 = vadd.f32 %v540, %v677
    %v679 = vpop.f32.mrf.mxu0
    %680 = vmatprep.mubr.f32.mxu0 0.0
    %681 = vmatmul.mubr.f32.gmra.mxu0 %v502
    %v682 = vpop.f32.mrf.mxu0
    %v683 = vadd.f32 %v540, %v682
    %v684 = vpop.f32.mrf.mxu0
    %685 = vmatprep.mubr.f32.mxu0 0.0
    %686 = vmatmul.mubr.f32.gmra.mxu0 %v503
    %v687 = vpop.f32.mrf.mxu0
    %v688 = vadd.f32 %v540, %v687
    %v689 = vpop.f32.mrf.mxu0
    %690 = vmatprep.mubr.f32.mxu0 0.0
    %691 = vmatmul.mubr.f32.gmra.mxu0 %v504
    %v692 = vpop.f32.mrf.mxu0
    %v693 = vadd.f32 %v540, %v692
    %v694 = vpop.f32.mrf.mxu0
    %695 = vmatprep.mubr.f32.mxu0 0.0
    %696 = vmatmul.mubr.f32.gmra.mxu0 %v505
    %v697 = vpop.f32.mrf.mxu0
    %v698 = vadd.f32 %v540, %v697
    %v699 = vpop.f32.mrf.mxu0
    %700 = vmatprep.mubr.f32.mxu0 0.0
    %701 = vmatmul.mubr.f32.gmra.mxu0 %v506
    %v702 = vpop.f32.mrf.mxu0
    %v703 = vadd.f32 %v540, %v702
    %v704 = vpop.f32.mrf.mxu0
    %705 = vmatprep.mubr.f32.mxu0 0.0
    %706 = vmatmul.mubr.f32.gmra.mxu0 %v507
    %v707 = vpop.f32.mrf.mxu0
    %v708 = vadd.f32 %v540, %v707
    %v709 = vpop.f32.mrf.mxu0
    %710 = vmatprep.mubr.f32.mxu0 0.0
    %711 = vmatmul.mubr.f32.gmra.mxu0 %v508
    %v712 = vpop.f32.mrf.mxu0
    %v713 = vadd.f32 %v540, %v712
    %v714 = vpop.f32.mrf.mxu0
    %715 = vmatprep.mubr.f32.mxu0 0.0
    %716 = vmatmul.mubr.f32.gmra.mxu0 %v509
    %v717 = vpop.f32.mrf.mxu0
    %v718 = vadd.f32 %v540, %v717
    %v719 = vpop.f32.mrf.mxu0
    %720 = vmatprep.mubr.f32.mxu0 0.0
    %721 = vmatmul.mubr.f32.gmra.mxu0 %v510
    %v722 = vpop.f32.mrf.mxu0
    %v723 = vadd.f32 %v540, %v722
    %v724 = vpop.f32.mrf.mxu0
    %725 = vmatprep.mubr.f32.mxu0 0.0
    %726 = vmatmul.mubr.f32.gmra.mxu0 %v511
    %v727 = vpop.f32.mrf.mxu0
    %v728 = vadd.f32 %v540, %v727
    %v729 = vpop.f32.mrf.mxu0
    %730 = vmatprep.mubr.f32.mxu0 0.0
    %731 = vmatmul.mubr.f32.gmra.mxu0 %v512
    %v732 = vpop.f32.mrf.mxu0
    %v733 = vadd.f32 %v540, %v732
    %v734 = vpop.f32.mrf.mxu0
    %735 = vmatprep.mubr.f32.mxu0 0.0
    %736 = vmatmul.mubr.f32.gmra.mxu0 %v513
    %v737 = vpop.f32.mrf.mxu0
    %v738 = vadd.f32 %v540, %v737
    %v739 = vpop.f32.mrf.mxu0
    %740 = vmatprep.mubr.f32.mxu0 0.0
    %741 = vmatmul.mubr.f32.gmra.mxu0 %v514
    %v742 = vpop.f32.mrf.mxu0
    %v743 = vadd.f32 %v540, %v742
    %v744 = vpop.f32.mrf.mxu0
    %745 = vmatprep.mubr.f32.mxu0 0.0
    %746 = vmatmul.mubr.f32.gmra.mxu0 %v515
    %v747 = vpop.f32.mrf.mxu0
    %v748 = vadd.f32 %v540, %v747
    %v749 = vpop.f32.mrf.mxu0
    %750 = vmatprep.mubr.f32.mxu0 0.0
    %751 = vmatmul.mubr.f32.gmra.mxu0 %v516
    %v752 = vpop.f32.mrf.mxu0
    %v753 = vadd.f32 %v540, %v752
    %v754 = vpop.f32.mrf.mxu0
    %755 = vmatprep.mubr.f32.mxu0 0.0
    %756 = vmatmul.mubr.f32.gmra.mxu0 %v517
    %v757 = vpop.f32.mrf.mxu0
    %v758 = vadd.f32 %v540, %v757
    %v759 = vpop.f32.mrf.mxu0
    %760 = vmatprep.mubr.f32.mxu0 0.0
    %761 = vmatmul.mubr.f32.gmra.mxu0 %v518
    %v762 = vpop.f32.mrf.mxu0
    %v763 = vadd.f32 %v540, %v762
    %v764 = vpop.f32.mrf.mxu0
    %765 = vdwg.mxu0
    %v766 = vmul.f32 %v608, 0.5
    %v767 = vmul.f32 %v613, 0.5
    %v768 = vmul.f32 %v618, 0.5
    %v769 = vmul.f32 %v623, 0.5
    %v770 = vmul.f32 %v628, 0.5
    %v771 = vmul.f32 %v633, 0.5
    %v772 = vmul.f32 %v638, 0.5
    %v773 = vmul.f32 %v643, 0.5
    %v774 = vmul.f32 %v648, 0.5
    %v775 = vmul.f32 %v653, 0.5
    %v776 = vmul.f32 %v658, 0.5
    %v777 = vmul.f32 %v663, 0.5
    %v778 = vmul.f32 %v668, 0.5
    %v779 = vmul.f32 %v673, 0.5
    %v780 = vmul.f32 %v678, 0.5
    %v781 = vmul.f32 %v683, 0.5
    %v782 = vmul.f32 %v688, 0.5
    %v783 = vmul.f32 %v693, 0.5
    %v784 = vmul.f32 %v698, 0.5
    %v785 = vmul.f32 %v703, 0.5
    %v786 = vmul.f32 %v708, 0.5
    %v787 = vmul.f32 %v713, 0.5
    %v788 = vmul.f32 %v718, 0.5
    %v789 = vmul.f32 %v723, 0.5
    %v790 = vmul.f32 %v728, 0.5
    %v791 = vmul.f32 %v733, 0.5
    %v792 = vmul.f32 %v738, 0.5
    %v793 = vmul.f32 %v743, 0.5
    %v794 = vmul.f32 %v748, 0.5
    %v795 = vmul.f32 %v753, 0.5
    %v796 = vmul.f32 %v758, 0.5
    %v797 = vmul.f32 %v763, 0.5
    %v798 = vtanh.pop %v766
    %v799 = vtanh.pop %v767
    %v800 = vtanh.pop %v768
    %v801 = vtanh.pop %v769
    %v802 = vtanh.pop %v770
    %v803 = vtanh.pop %v771
    %v804 = vtanh.pop %v772
    %v805 = vtanh.pop %v773
    %v806 = vtanh.pop %v774
    %v807 = vtanh.pop %v775
    %v808 = vtanh.pop %v776
    %v809 = vtanh.pop %v777
    %v810 = vtanh.pop %v778
    %v811 = vtanh.pop %v779
    %v812 = vtanh.pop %v780
    %v813 = vtanh.pop %v781
    %v814 = vtanh.pop %v782
    %v815 = vtanh.pop %v783
    %v816 = vtanh.pop %v784
    %v817 = vtanh.pop %v785
    %v818 = vtanh.pop %v786
    %v819 = vtanh.pop %v787
    %v820 = vtanh.pop %v788
    %v821 = vtanh.pop %v789
    %v822 = vtanh.pop %v790
    %v823 = vtanh.pop %v791
    %v824 = vtanh.pop %v792
    %v825 = vtanh.pop %v793
    %v826 = vtanh.pop %v794
    %v827 = vtanh.pop %v795
    %v828 = vtanh.pop %v796
    %v829 = vtanh.pop %v797
    %v830 = vmul.f32 %v798, 0.5
    %v831 = vmul.f32 %v799, 0.5
    %v832 = vmul.f32 %v800, 0.5
    %v833 = vmul.f32 %v801, 0.5
    %v834 = vmul.f32 %v802, 0.5
    %v835 = vmul.f32 %v803, 0.5
    %v836 = vmul.f32 %v804, 0.5
    %v837 = vmul.f32 %v805, 0.5
    %v838 = vmul.f32 %v806, 0.5
    %v839 = vmul.f32 %v807, 0.5
    %v840 = vmul.f32 %v808, 0.5
    %v841 = vmul.f32 %v809, 0.5
    %v842 = vmul.f32 %v810, 0.5
    %v843 = vmul.f32 %v811, 0.5
    %v844 = vmul.f32 %v812, 0.5
    %v845 = vmul.f32 %v813, 0.5
    %v846 = vmul.f32 %v814, 0.5
    %v847 = vmul.f32 %v815, 0.5
    %v848 = vmul.f32 %v816, 0.5
    %v849 = vmul.f32 %v817, 0.5
    %v850 = vmul.f32 %v818, 0.5
    %v851 = vmul.f32 %v819, 0.5
    %v852 = vmul.f32 %v820, 0.5
    %v853 = vmul.f32 %v821, 0.5
    %v854 = vmul.f32 %v822, 0.5
    %v855 = vmul.f32 %v823, 0.5
    %v856 = vmul.f32 %v824, 0.5
    %v857 = vmul.f32 %v825, 0.5
    %v858 = vmul.f32 %v826, 0.5
    %v859 = vmul.f32 %v827, 0.5
    %v860 = vmul.f32 %v828, 0.5
    %v861 = vmul.f32 %v829, 0.5
    %v862 = vadd.f32 %v830, 0.5
    %v863 = vadd.f32 %v831, 0.5
    %v864 = vadd.f32 %v832, 0.5
    %v865 = vadd.f32 %v833, 0.5
    %v866 = vadd.f32 %v834, 0.5
    %v867 = vadd.f32 %v835, 0.5
    %v868 = vadd.f32 %v836, 0.5
    %v869 = vadd.f32 %v837, 0.5
    %v870 = vadd.f32 %v838, 0.5
    %v871 = vadd.f32 %v839, 0.5
    %v872 = vadd.f32 %v840, 0.5
    %v873 = vadd.f32 %v841, 0.5
    %v874 = vadd.f32 %v842, 0.5
    %v875 = vadd.f32 %v843, 0.5
    %v876 = vadd.f32 %v844, 0.5
    %v877 = vadd.f32 %v845, 0.5
    %v878 = vadd.f32 %v846, 0.5
    %v879 = vadd.f32 %v847, 0.5
    %v880 = vadd.f32 %v848, 0.5
    %v881 = vadd.f32 %v849, 0.5
    %v882 = vadd.f32 %v850, 0.5
    %v883 = vadd.f32 %v851, 0.5
    %v884 = vadd.f32 %v852, 0.5
    %v885 = vadd.f32 %v853, 0.5
    %v886 = vadd.f32 %v854, 0.5
    %v887 = vadd.f32 %v855, 0.5
    %v888 = vadd.f32 %v856, 0.5
    %v889 = vadd.f32 %v857, 0.5
    %v890 = vadd.f32 %v858, 0.5
    %v891 = vadd.f32 %v859, 0.5
    %v892 = vadd.f32 %v860, 0.5
    %v893 = vadd.f32 %v861, 0.5
    %s894 = scalar_lea.vmem [#allocation2], 256
    %v895 = vld [vmem:[%s894] sm:$0xff]
    %v896 = vld [vmem:[%s894 + $0x8] sm:$0xff]
    %v897 = vld [vmem:[%s894 + $0x10] sm:$0xff]
    %v898 = vld [vmem:[%s894 + $0x18] sm:$0xff]
    %v899 = vld [vmem:[%s894 + $0x20] sm:$0xff]
    %v900 = vld [vmem:[%s894 + $0x28] sm:$0xff]
    %v901 = vld [vmem:[%s894 + $0x30] sm:$0xff]
    %v902 = vld [vmem:[%s894 + $0x38] sm:$0xff]
    %v903 = vld [vmem:[%s894 + $0x40] sm:$0xff]
    %v904 = vld [vmem:[%s894 + $0x48] sm:$0xff]
    %v905 = vld [vmem:[%s894 + $0x50] sm:$0xff]
    %v906 = vld [vmem:[%s894 + $0x58] sm:$0xff]
    %v907 = vld [vmem:[%s894 + $0x60] sm:$0xff]
    %v908 = vld [vmem:[%s894 + $0x68] sm:$0xff]
    %v909 = vld [vmem:[%s894 + $0x70] sm:$0xff]
    %v910 = vld [vmem:[%s894 + $0x78] sm:$0xff]
    %v911 = vld [vmem:[%s2 + $0x2] sm:$0x1]
    %v912 = vlaneseq
    %v913 = vshrl.u32 %v912, 7
    %v914 = vsub.s32 0, %v913
    %v915 = vrot.slane %v911, %v914
    %916 = vmatprep.subr.mxu0 0.0
    %917 = vmatpush1.msra.mxu0 %v910
    %918 = vmatprep.subr.mxu0 0.0
    %919 = vmatpush1.msra.mxu0 %v909
    %920 = vmatprep.subr.mxu0 0.0
    %921 = vmatpush1.msra.mxu0 %v908
    %922 = vmatprep.subr.mxu0 0.0
    %923 = vmatpush1.msra.mxu0 %v907
    %924 = vmatprep.subr.mxu0 0.0
    %925 = vmatpush1.msra.mxu0 %v906
    %926 = vmatprep.subr.mxu0 0.0
    %927 = vmatpush1.msra.mxu0 %v905
    %928 = vmatprep.subr.mxu0 0.0
    %929 = vmatpush1.msra.mxu0 %v904
    %930 = vmatprep.subr.mxu0 0.0
    %931 = vmatpush1.msra.mxu0 %v903
    %932 = vmatprep.subr.mxu0 0.0
    %933 = vmatpush1.msra.mxu0 %v902
    %934 = vmatprep.subr.mxu0 0.0
    %935 = vmatpush1.msra.mxu0 %v901
    %936 = vmatprep.subr.mxu0 0.0
    %937 = vmatpush1.msra.mxu0 %v900
    %938 = vmatprep.subr.mxu0 0.0
    %939 = vmatpush1.msra.mxu0 %v899
    %940 = vmatprep.subr.mxu0 0.0
    %941 = vmatpush1.msra.mxu0 %v898
    %942 = vmatprep.subr.mxu0 0.0
    %943 = vmatpush1.msra.mxu0 %v897
    %944 = vmatprep.subr.mxu0 0.0
    %945 = vmatpush1.msra.mxu0 %v896
    %946 = vmatprep.subr.mxu0 0.0
    %947 = vmatpush1.msra.mxu0 %v895
    %948 = vmatprep.subr.mxu0 0.0
    %949 = vmatpush2.msra.mxu0 0.0
    %950 = vmatprep.subr.mxu0 0.0
    %951 = vmatpush2.msra.mxu0 0.0
    %952 = vmatprep.subr.mxu0 0.0
    %953 = vmatpush2.msra.mxu0 0.0
    %954 = vmatprep.subr.mxu0 0.0
    %955 = vmatpush2.msra.mxu0 0.0
    %956 = vmatprep.subr.mxu0 0.0
    %957 = vmatpush2.msra.mxu0 0.0
    %958 = vmatprep.subr.mxu0 0.0
    %959 = vmatpush2.msra.mxu0 0.0
    %960 = vmatprep.subr.mxu0 0.0
    %961 = vmatpush2.msra.mxu0 0.0
    %962 = vmatprep.subr.mxu0 0.0
    %963 = vmatpush2.msra.mxu0 0.0
    %964 = vmatprep.subr.mxu0 0.0
    %965 = vmatpush2.msra.mxu0 0.0
    %966 = vmatprep.subr.mxu0 0.0
    %967 = vmatpush2.msra.mxu0 0.0
    %968 = vmatprep.subr.mxu0 0.0
    %969 = vmatpush2.msra.mxu0 0.0
    %970 = vmatprep.subr.mxu0 0.0
    %971 = vmatpush2.msra.mxu0 0.0
    %972 = vmatprep.subr.mxu0 0.0
    %973 = vmatpush2.msra.mxu0 0.0
    %974 = vmatprep.subr.mxu0 0.0
    %975 = vmatpush2.msra.mxu0 0.0
    %976 = vmatprep.subr.mxu0 0.0
    %977 = vmatpush2.msra.mxu0 0.0
    %978 = vmatprep.subr.mxu0 0.0
    %979 = vmatpush2.msra.mxu0 0.0
    %980 = vmatprep.mubr.f32.mxu0 0.0
    %981 = vmatmul.mubr.f32.gmra.mxu0 %v862
    %v982 = vpop.f32.mrf.mxu0
    %v983 = vadd.f32 %v915, %v982
    %v984 = vpop.f32.mrf.mxu0
    %985 = vmatprep.mubr.f32.mxu0 0.0
    %986 = vmatmul.mubr.f32.gmra.mxu0 %v863
    %v987 = vpop.f32.mrf.mxu0
    %v988 = vadd.f32 %v915, %v987
    %v989 = vpop.f32.mrf.mxu0
    %990 = vmatprep.mubr.f32.mxu0 0.0
    %991 = vmatmul.mubr.f32.gmra.mxu0 %v864
    %v992 = vpop.f32.mrf.mxu0
    %v993 = vadd.f32 %v915, %v992
    %v994 = vpop.f32.mrf.mxu0
    %995 = vmatprep.mubr.f32.mxu0 0.0
    %996 = vmatmul.mubr.f32.gmra.mxu0 %v865
    %v997 = vpop.f32.mrf.mxu0
    %v998 = vadd.f32 %v915, %v997
    %v999 = vpop.f32.mrf.mxu0
    %1000 = vmatprep.mubr.f32.mxu0 0.0
    %1001 = vmatmul.mubr.f32.gmra.mxu0 %v866
    %v1002 = vpop.f32.mrf.mxu0
    %v1003 = vadd.f32 %v915, %v1002
    %v1004 = vpop.f32.mrf.mxu0
    %1005 = vmatprep.mubr.f32.mxu0 0.0
    %1006 = vmatmul.mubr.f32.gmra.mxu0 %v867
    %v1007 = vpop.f32.mrf.mxu0
    %v1008 = vadd.f32 %v915, %v1007
    %v1009 = vpop.f32.mrf.mxu0
    %1010 = vmatprep.mubr.f32.mxu0 0.0
    %1011 = vmatmul.mubr.f32.gmra.mxu0 %v868
    %v1012 = vpop.f32.mrf.mxu0
    %v1013 = vadd.f32 %v915, %v1012
    %v1014 = vpop.f32.mrf.mxu0
    %1015 = vmatprep.mubr.f32.mxu0 0.0
    %1016 = vmatmul.mubr.f32.gmra.mxu0 %v869
    %v1017 = vpop.f32.mrf.mxu0
    %v1018 = vadd.f32 %v915, %v1017
    %v1019 = vpop.f32.mrf.mxu0
    %1020 = vmatprep.mubr.f32.mxu0 0.0
    %1021 = vmatmul.mubr.f32.gmra.mxu0 %v870
    %v1022 = vpop.f32.mrf.mxu0
    %v1023 = vadd.f32 %v915, %v1022
    %v1024 = vpop.f32.mrf.mxu0
    %1025 = vmatprep.mubr.f32.mxu0 0.0
    %1026 = vmatmul.mubr.f32.gmra.mxu0 %v871
    %v1027 = vpop.f32.mrf.mxu0
    %v1028 = vadd.f32 %v915, %v1027
    %v1029 = vpop.f32.mrf.mxu0
    %1030 = vmatprep.mubr.f32.mxu0 0.0
    %1031 = vmatmul.mubr.f32.gmra.mxu0 %v872
    %v1032 = vpop.f32.mrf.mxu0
    %v1033 = vadd.f32 %v915, %v1032
    %v1034 = vpop.f32.mrf.mxu0
    %1035 = vmatprep.mubr.f32.mxu0 0.0
    %1036 = vmatmul.mubr.f32.gmra.mxu0 %v873
    %v1037 = vpop.f32.mrf.mxu0
    %v1038 = vadd.f32 %v915, %v1037
    %v1039 = vpop.f32.mrf.mxu0
    %1040 = vmatprep.mubr.f32.mxu0 0.0
    %1041 = vmatmul.mubr.f32.gmra.mxu0 %v874
    %v1042 = vpop.f32.mrf.mxu0
    %v1043 = vadd.f32 %v915, %v1042
    %v1044 = vpop.f32.mrf.mxu0
    %1045 = vmatprep.mubr.f32.mxu0 0.0
    %1046 = vmatmul.mubr.f32.gmra.mxu0 %v875
    %v1047 = vpop.f32.mrf.mxu0
    %v1048 = vadd.f32 %v915, %v1047
    %v1049 = vpop.f32.mrf.mxu0
    %1050 = vmatprep.mubr.f32.mxu0 0.0
    %1051 = vmatmul.mubr.f32.gmra.mxu0 %v876
    %v1052 = vpop.f32.mrf.mxu0
    %v1053 = vadd.f32 %v915, %v1052
    %v1054 = vpop.f32.mrf.mxu0
    %1055 = vmatprep.mubr.f32.mxu0 0.0
    %1056 = vmatmul.mubr.f32.gmra.mxu0 %v877
    %v1057 = vpop.f32.mrf.mxu0
    %v1058 = vadd.f32 %v915, %v1057
    %v1059 = vpop.f32.mrf.mxu0
    %1060 = vmatprep.mubr.f32.mxu0 0.0
    %1061 = vmatmul.mubr.f32.gmra.mxu0 %v878
    %v1062 = vpop.f32.mrf.mxu0
    %v1063 = vadd.f32 %v915, %v1062
    %v1064 = vpop.f32.mrf.mxu0
    %1065 = vmatprep.mubr.f32.mxu0 0.0
    %1066 = vmatmul.mubr.f32.gmra.mxu0 %v879
    %v1067 = vpop.f32.mrf.mxu0
    %v1068 = vadd.f32 %v915, %v1067
    %v1069 = vpop.f32.mrf.mxu0
    %1070 = vmatprep.mubr.f32.mxu0 0.0
    %1071 = vmatmul.mubr.f32.gmra.mxu0 %v880
    %v1072 = vpop.f32.mrf.mxu0
    %v1073 = vadd.f32 %v915, %v1072
    %v1074 = vpop.f32.mrf.mxu0
    %1075 = vmatprep.mubr.f32.mxu0 0.0
    %1076 = vmatmul.mubr.f32.gmra.mxu0 %v881
    %v1077 = vpop.f32.mrf.mxu0
    %v1078 = vadd.f32 %v915, %v1077
    %v1079 = vpop.f32.mrf.mxu0
    %1080 = vmatprep.mubr.f32.mxu0 0.0
    %1081 = vmatmul.mubr.f32.gmra.mxu0 %v882
    %v1082 = vpop.f32.mrf.mxu0
    %v1083 = vadd.f32 %v915, %v1082
    %v1084 = vpop.f32.mrf.mxu0
    %1085 = vmatprep.mubr.f32.mxu0 0.0
    %1086 = vmatmul.mubr.f32.gmra.mxu0 %v883
    %v1087 = vpop.f32.mrf.mxu0
    %v1088 = vadd.f32 %v915, %v1087
    %v1089 = vpop.f32.mrf.mxu0
    %1090 = vmatprep.mubr.f32.mxu0 0.0
    %1091 = vmatmul.mubr.f32.gmra.mxu0 %v884
    %v1092 = vpop.f32.mrf.mxu0
    %v1093 = vadd.f32 %v915, %v1092
    %v1094 = vpop.f32.mrf.mxu0
    %1095 = vmatprep.mubr.f32.mxu0 0.0
    %1096 = vmatmul.mubr.f32.gmra.mxu0 %v885
    %v1097 = vpop.f32.mrf.mxu0
    %v1098 = vadd.f32 %v915, %v1097
    %v1099 = vpop.f32.mrf.mxu0
    %1100 = vmatprep.mubr.f32.mxu0 0.0
    %1101 = vmatmul.mubr.f32.gmra.mxu0 %v886
    %v1102 = vpop.f32.mrf.mxu0
    %v1103 = vadd.f32 %v915, %v1102
    %v1104 = vpop.f32.mrf.mxu0
    %1105 = vmatprep.mubr.f32.mxu0 0.0
    %1106 = vmatmul.mubr.f32.gmra.mxu0 %v887
    %v1107 = vpop.f32.mrf.mxu0
    %v1108 = vadd.f32 %v915, %v1107
    %v1109 = vpop.f32.mrf.mxu0
    %1110 = vmatprep.mubr.f32.mxu0 0.0
    %1111 = vmatmul.mubr.f32.gmra.mxu0 %v888
    %v1112 = vpop.f32.mrf.mxu0
    %v1113 = vadd.f32 %v915, %v1112
    %v1114 = vpop.f32.mrf.mxu0
    %1115 = vmatprep.mubr.f32.mxu0 0.0
    %1116 = vmatmul.mubr.f32.gmra.mxu0 %v889
    %v1117 = vpop.f32.mrf.mxu0
    %v1118 = vadd.f32 %v915, %v1117
    %v1119 = vpop.f32.mrf.mxu0
    %1120 = vmatprep.mubr.f32.mxu0 0.0
    %1121 = vmatmul.mubr.f32.gmra.mxu0 %v890
    %v1122 = vpop.f32.mrf.mxu0
    %v1123 = vadd.f32 %v915, %v1122
    %v1124 = vpop.f32.mrf.mxu0
    %1125 = vmatprep.mubr.f32.mxu0 0.0
    %1126 = vmatmul.mubr.f32.gmra.mxu0 %v891
    %v1127 = vpop.f32.mrf.mxu0
    %v1128 = vadd.f32 %v915, %v1127
    %v1129 = vpop.f32.mrf.mxu0
    %1130 = vmatprep.mubr.f32.mxu0 0.0
    %1131 = vmatmul.mubr.f32.gmra.mxu0 %v892
    %v1132 = vpop.f32.mrf.mxu0
    %v1133 = vadd.f32 %v915, %v1132
    %v1134 = vpop.f32.mrf.mxu0
    %1135 = vmatprep.mubr.f32.mxu0 0.0
    %1136 = vmatmul.mubr.f32.gmra.mxu0 %v893
    %v1137 = vpop.f32.mrf.mxu0
    %v1138 = vadd.f32 %v915, %v1137
    %v1139 = vpop.f32.mrf.mxu0
    %1140 = vdwg.mxu0
    %v1141 = vmul.f32 %v983, 0.5
    %v1142 = vmul.f32 %v988, 0.5
    %v1143 = vmul.f32 %v993, 0.5
    %v1144 = vmul.f32 %v998, 0.5
    %v1145 = vmul.f32 %v1003, 0.5
    %v1146 = vmul.f32 %v1008, 0.5
    %v1147 = vmul.f32 %v1013, 0.5
    %v1148 = vmul.f32 %v1018, 0.5
    %v1149 = vmul.f32 %v1023, 0.5
    %v1150 = vmul.f32 %v1028, 0.5
    %v1151 = vmul.f32 %v1033, 0.5
    %v1152 = vmul.f32 %v1038, 0.5
    %v1153 = vmul.f32 %v1043, 0.5
    %v1154 = vmul.f32 %v1048, 0.5
    %v1155 = vmul.f32 %v1053, 0.5
    %v1156 = vmul.f32 %v1058, 0.5
    %v1157 = vmul.f32 %v1063, 0.5
    %v1158 = vmul.f32 %v1068, 0.5
    %v1159 = vmul.f32 %v1073, 0.5
    %v1160 = vmul.f32 %v1078, 0.5
    %v1161 = vmul.f32 %v1083, 0.5
    %v1162 = vmul.f32 %v1088, 0.5
    %v1163 = vmul.f32 %v1093, 0.5
    %v1164 = vmul.f32 %v1098, 0.5
    %v1165 = vmul.f32 %v1103, 0.5
    %v1166 = vmul.f32 %v1108, 0.5
    %v1167 = vmul.f32 %v1113, 0.5
    %v1168 = vmul.f32 %v1118, 0.5
    %v1169 = vmul.f32 %v1123, 0.5
    %v1170 = vmul.f32 %v1128, 0.5
    %v1171 = vmul.f32 %v1133, 0.5
    %v1172 = vmul.f32 %v1138, 0.5
    %v1173 = vtanh.pop %v1141
    %v1174 = vtanh.pop %v1142
    %v1175 = vtanh.pop %v1143
    %v1176 = vtanh.pop %v1144
    %v1177 = vtanh.pop %v1145
    %v1178 = vtanh.pop %v1146
    %v1179 = vtanh.pop %v1147
    %v1180 = vtanh.pop %v1148
    %v1181 = vtanh.pop %v1149
    %v1182 = vtanh.pop %v1150
    %v1183 = vtanh.pop %v1151
    %v1184 = vtanh.pop %v1152
    %v1185 = vtanh.pop %v1153
    %v1186 = vtanh.pop %v1154
    %v1187 = vtanh.pop %v1155
    %v1188 = vtanh.pop %v1156
    %v1189 = vtanh.pop %v1157
    %v1190 = vtanh.pop %v1158
    %v1191 = vtanh.pop %v1159
    %v1192 = vtanh.pop %v1160
    %v1193 = vtanh.pop %v1161
    %v1194 = vtanh.pop %v1162
    %v1195 = vtanh.pop %v1163
    %v1196 = vtanh.pop %v1164
    %v1197 = vtanh.pop %v1165
    %v1198 = vtanh.pop %v1166
    %v1199 = vtanh.pop %v1167
    %v1200 = vtanh.pop %v1168
    %v1201 = vtanh.pop %v1169
    %v1202 = vtanh.pop %v1170
    %v1203 = vtanh.pop %v1171
    %v1204 = vtanh.pop %v1172
    %v1205 = vmul.f32 %v1173, 0.5
    %v1206 = vmul.f32 %v1174, 0.5
    %v1207 = vmul.f32 %v1175, 0.5
    %v1208 = vmul.f32 %v1176, 0.5
    %v1209 = vmul.f32 %v1177, 0.5
    %v1210 = vmul.f32 %v1178, 0.5
    %v1211 = vmul.f32 %v1179, 0.5
    %v1212 = vmul.f32 %v1180, 0.5
    %v1213 = vmul.f32 %v1181, 0.5
    %v1214 = vmul.f32 %v1182, 0.5
    %v1215 = vmul.f32 %v1183, 0.5
    %v1216 = vmul.f32 %v1184, 0.5
    %v1217 = vmul.f32 %v1185, 0.5
    %v1218 = vmul.f32 %v1186, 0.5
    %v1219 = vmul.f32 %v1187, 0.5
    %v1220 = vmul.f32 %v1188, 0.5
    %v1221 = vmul.f32 %v1189, 0.5
    %v1222 = vmul.f32 %v1190, 0.5
    %v1223 = vmul.f32 %v1191, 0.5
    %v1224 = vmul.f32 %v1192, 0.5
    %v1225 = vmul.f32 %v1193, 0.5
    %v1226 = vmul.f32 %v1194, 0.5
    %v1227 = vmul.f32 %v1195, 0.5
    %v1228 = vmul.f32 %v1196, 0.5
    %v1229 = vmul.f32 %v1197, 0.5
    %v1230 = vmul.f32 %v1198, 0.5
    %v1231 = vmul.f32 %v1199, 0.5
    %v1232 = vmul.f32 %v1200, 0.5
    %v1233 = vmul.f32 %v1201, 0.5
    %v1234 = vmul.f32 %v1202, 0.5
    %v1235 = vmul.f32 %v1203, 0.5
    %v1236 = vmul.f32 %v1204, 0.5
    %v1237 = vadd.f32 %v1205, 0.5
    %v1238 = vadd.f32 %v1206, 0.5
    %v1239 = vadd.f32 %v1207, 0.5
    %v1240 = vadd.f32 %v1208, 0.5
    %v1241 = vadd.f32 %v1209, 0.5
    %v1242 = vadd.f32 %v1210, 0.5
    %v1243 = vadd.f32 %v1211, 0.5
    %v1244 = vadd.f32 %v1212, 0.5
    %v1245 = vadd.f32 %v1213, 0.5
    %v1246 = vadd.f32 %v1214, 0.5
    %v1247 = vadd.f32 %v1215, 0.5
    %v1248 = vadd.f32 %v1216, 0.5
    %v1249 = vadd.f32 %v1217, 0.5
    %v1250 = vadd.f32 %v1218, 0.5
    %v1251 = vadd.f32 %v1219, 0.5
    %v1252 = vadd.f32 %v1220, 0.5
    %v1253 = vadd.f32 %v1221, 0.5
    %v1254 = vadd.f32 %v1222, 0.5
    %v1255 = vadd.f32 %v1223, 0.5
    %v1256 = vadd.f32 %v1224, 0.5
    %v1257 = vadd.f32 %v1225, 0.5
    %v1258 = vadd.f32 %v1226, 0.5
    %v1259 = vadd.f32 %v1227, 0.5
    %v1260 = vadd.f32 %v1228, 0.5
    %v1261 = vadd.f32 %v1229, 0.5
    %v1262 = vadd.f32 %v1230, 0.5
    %v1263 = vadd.f32 %v1231, 0.5
    %v1264 = vadd.f32 %v1232, 0.5
    %v1265 = vadd.f32 %v1233, 0.5
    %v1266 = vadd.f32 %v1234, 0.5
    %v1267 = vadd.f32 %v1235, 0.5
    %v1268 = vadd.f32 %v1236, 0.5
    %s1269 = scalar_lea.vmem [#allocation2], 384
    %v1270 = vld [vmem:[%s1269] sm:$0xff]
    %v1271 = vld [vmem:[%s1269 + $0x8] sm:$0xff]
    %v1272 = vld [vmem:[%s1269 + $0x10] sm:$0xff]
    %v1273 = vld [vmem:[%s1269 + $0x18] sm:$0xff]
    %v1274 = vld [vmem:[%s1269 + $0x20] sm:$0xff]
    %v1275 = vld [vmem:[%s1269 + $0x28] sm:$0xff]
    %v1276 = vld [vmem:[%s1269 + $0x30] sm:$0xff]
    %v1277 = vld [vmem:[%s1269 + $0x38] sm:$0xff]
    %v1278 = vld [vmem:[%s1269 + $0x40] sm:$0xff]
    %v1279 = vld [vmem:[%s1269 + $0x48] sm:$0xff]
    %v1280 = vld [vmem:[%s1269 + $0x50] sm:$0xff]
    %v1281 = vld [vmem:[%s1269 + $0x58] sm:$0xff]
    %v1282 = vld [vmem:[%s1269 + $0x60] sm:$0xff]
    %v1283 = vld [vmem:[%s1269 + $0x68] sm:$0xff]
    %v1284 = vld [vmem:[%s1269 + $0x70] sm:$0xff]
    %v1285 = vld [vmem:[%s1269 + $0x78] sm:$0xff]
    %v1286 = vld [vmem:[%s2 + $0x3] sm:$0x1]
    %v1287 = vlaneseq
    %v1288 = vshrl.u32 %v1287, 7
    %v1289 = vsub.s32 0, %v1288
    %v1290 = vrot.slane %v1286, %v1289
    %1291 = vmatprep.subr.mxu0 0.0
    %1292 = vmatpush1.msra.mxu0 %v1285
    %1293 = vmatprep.subr.mxu0 0.0
    %1294 = vmatpush1.msra.mxu0 %v1284
    %1295 = vmatprep.subr.mxu0 0.0
    %1296 = vmatpush1.msra.mxu0 %v1283
    %1297 = vmatprep.subr.mxu0 0.0
    %1298 = vmatpush1.msra.mxu0 %v1282
    %1299 = vmatprep.subr.mxu0 0.0
    %1300 = vmatpush1.msra.mxu0 %v1281
    %1301 = vmatprep.subr.mxu0 0.0
    %1302 = vmatpush1.msra.mxu0 %v1280
    %1303 = vmatprep.subr.mxu0 0.0
    %1304 = vmatpush1.msra.mxu0 %v1279
    %1305 = vmatprep.subr.mxu0 0.0
    %1306 = vmatpush1.msra.mxu0 %v1278
    %1307 = vmatprep.subr.mxu0 0.0
    %1308 = vmatpush1.msra.mxu0 %v1277
    %1309 = vmatprep.subr.mxu0 0.0
    %1310 = vmatpush1.msra.mxu0 %v1276
    %1311 = vmatprep.subr.mxu0 0.0
    %1312 = vmatpush1.msra.mxu0 %v1275
    %1313 = vmatprep.subr.mxu0 0.0
    %1314 = vmatpush1.msra.mxu0 %v1274
    %1315 = vmatprep.subr.mxu0 0.0
    %1316 = vmatpush1.msra.mxu0 %v1273
    %1317 = vmatprep.subr.mxu0 0.0
    %1318 = vmatpush1.msra.mxu0 %v1272
    %1319 = vmatprep.subr.mxu0 0.0
    %1320 = vmatpush1.msra.mxu0 %v1271
    %1321 = vmatprep.subr.mxu0 0.0
    %1322 = vmatpush1.msra.mxu0 %v1270
    %1323 = vmatprep.subr.mxu0 0.0
    %1324 = vmatpush2.msra.mxu0 0.0
    %1325 = vmatprep.subr.mxu0 0.0
    %1326 = vmatpush2.msra.mxu0 0.0
    %1327 = vmatprep.subr.mxu0 0.0
    %1328 = vmatpush2.msra.mxu0 0.0
    %1329 = vmatprep.subr.mxu0 0.0
    %1330 = vmatpush2.msra.mxu0 0.0
    %1331 = vmatprep.subr.mxu0 0.0
    %1332 = vmatpush2.msra.mxu0 0.0
    %1333 = vmatprep.subr.mxu0 0.0
    %1334 = vmatpush2.msra.mxu0 0.0
    %1335 = vmatprep.subr.mxu0 0.0
    %1336 = vmatpush2.msra.mxu0 0.0
    %1337 = vmatprep.subr.mxu0 0.0
    %1338 = vmatpush2.msra.mxu0 0.0
    %1339 = vmatprep.subr.mxu0 0.0
    %1340 = vmatpush2.msra.mxu0 0.0
    %1341 = vmatprep.subr.mxu0 0.0
    %1342 = vmatpush2.msra.mxu0 0.0
    %1343 = vmatprep.subr.mxu0 0.0
    %1344 = vmatpush2.msra.mxu0 0.0
    %1345 = vmatprep.subr.mxu0 0.0
    %1346 = vmatpush2.msra.mxu0 0.0
    %1347 = vmatprep.subr.mxu0 0.0
    %1348 = vmatpush2.msra.mxu0 0.0
    %1349 = vmatprep.subr.mxu0 0.0
    %1350 = vmatpush2.msra.mxu0 0.0
    %1351 = vmatprep.subr.mxu0 0.0
    %1352 = vmatpush2.msra.mxu0 0.0
    %1353 = vmatprep.subr.mxu0 0.0
    %1354 = vmatpush2.msra.mxu0 0.0
    %1355 = vmatprep.mubr.f32.mxu0 0.0
    %1356 = vmatmul.mubr.f32.gmra.mxu0 %v1237
    %v1357 = vpop.f32.mrf.mxu0
    %v1358 = vadd.f32 %v1290, %v1357
    %v1359 = vpop.f32.mrf.mxu0
    %1360 = vmatprep.mubr.f32.mxu0 0.0
    %1361 = vmatmul.mubr.f32.gmra.mxu0 %v1238
    %v1362 = vpop.f32.mrf.mxu0
    %v1363 = vadd.f32 %v1290, %v1362
    %v1364 = vpop.f32.mrf.mxu0
    %1365 = vmatprep.mubr.f32.mxu0 0.0
    %1366 = vmatmul.mubr.f32.gmra.mxu0 %v1239
    %v1367 = vpop.f32.mrf.mxu0
    %v1368 = vadd.f32 %v1290, %v1367
    %v1369 = vpop.f32.mrf.mxu0
    %1370 = vmatprep.mubr.f32.mxu0 0.0
    %1371 = vmatmul.mubr.f32.gmra.mxu0 %v1240
    %v1372 = vpop.f32.mrf.mxu0
    %v1373 = vadd.f32 %v1290, %v1372
    %v1374 = vpop.f32.mrf.mxu0
    %1375 = vmatprep.mubr.f32.mxu0 0.0
    %1376 = vmatmul.mubr.f32.gmra.mxu0 %v1241
    %v1377 = vpop.f32.mrf.mxu0
    %v1378 = vadd.f32 %v1290, %v1377
    %v1379 = vpop.f32.mrf.mxu0
    %1380 = vmatprep.mubr.f32.mxu0 0.0
    %1381 = vmatmul.mubr.f32.gmra.mxu0 %v1242
    %v1382 = vpop.f32.mrf.mxu0
    %v1383 = vadd.f32 %v1290, %v1382
    %v1384 = vpop.f32.mrf.mxu0
    %1385 = vmatprep.mubr.f32.mxu0 0.0
    %1386 = vmatmul.mubr.f32.gmra.mxu0 %v1243
    %v1387 = vpop.f32.mrf.mxu0
    %v1388 = vadd.f32 %v1290, %v1387
    %v1389 = vpop.f32.mrf.mxu0
    %1390 = vmatprep.mubr.f32.mxu0 0.0
    %1391 = vmatmul.mubr.f32.gmra.mxu0 %v1244
    %v1392 = vpop.f32.mrf.mxu0
    %v1393 = vadd.f32 %v1290, %v1392
    %v1394 = vpop.f32.mrf.mxu0
    %1395 = vmatprep.mubr.f32.mxu0 0.0
    %1396 = vmatmul.mubr.f32.gmra.mxu0 %v1245
    %v1397 = vpop.f32.mrf.mxu0
    %v1398 = vadd.f32 %v1290, %v1397
    %v1399 = vpop.f32.mrf.mxu0
    %1400 = vmatprep.mubr.f32.mxu0 0.0
    %1401 = vmatmul.mubr.f32.gmra.mxu0 %v1246
    %v1402 = vpop.f32.mrf.mxu0
    %v1403 = vadd.f32 %v1290, %v1402
    %v1404 = vpop.f32.mrf.mxu0
    %1405 = vmatprep.mubr.f32.mxu0 0.0
    %1406 = vmatmul.mubr.f32.gmra.mxu0 %v1247
    %v1407 = vpop.f32.mrf.mxu0
    %v1408 = vadd.f32 %v1290, %v1407
    %v1409 = vpop.f32.mrf.mxu0
    %1410 = vmatprep.mubr.f32.mxu0 0.0
    %1411 = vmatmul.mubr.f32.gmra.mxu0 %v1248
    %v1412 = vpop.f32.mrf.mxu0
    %v1413 = vadd.f32 %v1290, %v1412
    %v1414 = vpop.f32.mrf.mxu0
    %1415 = vmatprep.mubr.f32.mxu0 0.0
    %1416 = vmatmul.mubr.f32.gmra.mxu0 %v1249
    %v1417 = vpop.f32.mrf.mxu0
    %v1418 = vadd.f32 %v1290, %v1417
    %v1419 = vpop.f32.mrf.mxu0
    %1420 = vmatprep.mubr.f32.mxu0 0.0
    %1421 = vmatmul.mubr.f32.gmra.mxu0 %v1250
    %v1422 = vpop.f32.mrf.mxu0
    %v1423 = vadd.f32 %v1290, %v1422
    %v1424 = vpop.f32.mrf.mxu0
    %1425 = vmatprep.mubr.f32.mxu0 0.0
    %1426 = vmatmul.mubr.f32.gmra.mxu0 %v1251
    %v1427 = vpop.f32.mrf.mxu0
    %v1428 = vadd.f32 %v1290, %v1427
    %v1429 = vpop.f32.mrf.mxu0
    %1430 = vmatprep.mubr.f32.mxu0 0.0
    %1431 = vmatmul.mubr.f32.gmra.mxu0 %v1252
    %v1432 = vpop.f32.mrf.mxu0
    %v1433 = vadd.f32 %v1290, %v1432
    %v1434 = vpop.f32.mrf.mxu0
    %1435 = vmatprep.mubr.f32.mxu0 0.0
    %1436 = vmatmul.mubr.f32.gmra.mxu0 %v1253
    %v1437 = vpop.f32.mrf.mxu0
    %v1438 = vadd.f32 %v1290, %v1437
    %v1439 = vpop.f32.mrf.mxu0
    %1440 = vmatprep.mubr.f32.mxu0 0.0
    %1441 = vmatmul.mubr.f32.gmra.mxu0 %v1254
    %v1442 = vpop.f32.mrf.mxu0
    %v1443 = vadd.f32 %v1290, %v1442
    %v1444 = vpop.f32.mrf.mxu0
    %1445 = vmatprep.mubr.f32.mxu0 0.0
    %1446 = vmatmul.mubr.f32.gmra.mxu0 %v1255
    %v1447 = vpop.f32.mrf.mxu0
    %v1448 = vadd.f32 %v1290, %v1447
    %v1449 = vpop.f32.mrf.mxu0
    %1450 = vmatprep.mubr.f32.mxu0 0.0
    %1451 = vmatmul.mubr.f32.gmra.mxu0 %v1256
    %v1452 = vpop.f32.mrf.mxu0
    %v1453 = vadd.f32 %v1290, %v1452
    %v1454 = vpop.f32.mrf.mxu0
    %1455 = vmatprep.mubr.f32.mxu0 0.0
    %1456 = vmatmul.mubr.f32.gmra.mxu0 %v1257
    %v1457 = vpop.f32.mrf.mxu0
    %v1458 = vadd.f32 %v1290, %v1457
    %v1459 = vpop.f32.mrf.mxu0
    %1460 = vmatprep.mubr.f32.mxu0 0.0
    %1461 = vmatmul.mubr.f32.gmra.mxu0 %v1258
    %v1462 = vpop.f32.mrf.mxu0
    %v1463 = vadd.f32 %v1290, %v1462
    %v1464 = vpop.f32.mrf.mxu0
    %1465 = vmatprep.mubr.f32.mxu0 0.0
    %1466 = vmatmul.mubr.f32.gmra.mxu0 %v1259
    %v1467 = vpop.f32.mrf.mxu0
    %v1468 = vadd.f32 %v1290, %v1467
    %v1469 = vpop.f32.mrf.mxu0
    %1470 = vmatprep.mubr.f32.mxu0 0.0
    %1471 = vmatmul.mubr.f32.gmra.mxu0 %v1260
    %v1472 = vpop.f32.mrf.mxu0
    %v1473 = vadd.f32 %v1290, %v1472
    %v1474 = vpop.f32.mrf.mxu0
    %1475 = vmatprep.mubr.f32.mxu0 0.0
    %1476 = vmatmul.mubr.f32.gmra.mxu0 %v1261
    %v1477 = vpop.f32.mrf.mxu0
    %v1478 = vadd.f32 %v1290, %v1477
    %v1479 = vpop.f32.mrf.mxu0
    %1480 = vmatprep.mubr.f32.mxu0 0.0
    %1481 = vmatmul.mubr.f32.gmra.mxu0 %v1262
    %v1482 = vpop.f32.mrf.mxu0
    %v1483 = vadd.f32 %v1290, %v1482
    %v1484 = vpop.f32.mrf.mxu0
    %1485 = vmatprep.mubr.f32.mxu0 0.0
    %1486 = vmatmul.mubr.f32.gmra.mxu0 %v1263
    %v1487 = vpop.f32.mrf.mxu0
    %v1488 = vadd.f32 %v1290, %v1487
    %v1489 = vpop.f32.mrf.mxu0
    %1490 = vmatprep.mubr.f32.mxu0 0.0
    %1491 = vmatmul.mubr.f32.gmra.mxu0 %v1264
    %v1492 = vpop.f32.mrf.mxu0
    %v1493 = vadd.f32 %v1290, %v1492
    %v1494 = vpop.f32.mrf.mxu0
    %1495 = vmatprep.mubr.f32.mxu0 0.0
    %1496 = vmatmul.mubr.f32.gmra.mxu0 %v1265
    %v1497 = vpop.f32.mrf.mxu0
    %v1498 = vadd.f32 %v1290, %v1497
    %v1499 = vpop.f32.mrf.mxu0
    %1500 = vmatprep.mubr.f32.mxu0 0.0
    %1501 = vmatmul.mubr.f32.gmra.mxu0 %v1266
    %v1502 = vpop.f32.mrf.mxu0
    %v1503 = vadd.f32 %v1290, %v1502
    %v1504 = vpop.f32.mrf.mxu0
    %1505 = vmatprep.mubr.f32.mxu0 0.0
    %1506 = vmatmul.mubr.f32.gmra.mxu0 %v1267
    %v1507 = vpop.f32.mrf.mxu0
    %v1508 = vadd.f32 %v1290, %v1507
    %v1509 = vpop.f32.mrf.mxu0
    %1510 = vmatprep.mubr.f32.mxu0 0.0
    %1511 = vmatmul.mubr.f32.gmra.mxu0 %v1268
    %v1512 = vpop.f32.mrf.mxu0
    %v1513 = vadd.f32 %v1290, %v1512
    %v1514 = vpop.f32.mrf.mxu0
    %1515 = vdwg.mxu0
    %v1516 = vmul.f32 %v1358, 0.5
    %v1517 = vmul.f32 %v1363, 0.5
    %v1518 = vmul.f32 %v1368, 0.5
    %v1519 = vmul.f32 %v1373, 0.5
    %v1520 = vmul.f32 %v1378, 0.5
    %v1521 = vmul.f32 %v1383, 0.5
    %v1522 = vmul.f32 %v1388, 0.5
    %v1523 = vmul.f32 %v1393, 0.5
    %v1524 = vmul.f32 %v1398, 0.5
    %v1525 = vmul.f32 %v1403, 0.5
    %v1526 = vmul.f32 %v1408, 0.5
    %v1527 = vmul.f32 %v1413, 0.5
    %v1528 = vmul.f32 %v1418, 0.5
    %v1529 = vmul.f32 %v1423, 0.5
    %v1530 = vmul.f32 %v1428, 0.5
    %v1531 = vmul.f32 %v1433, 0.5
    %v1532 = vmul.f32 %v1438, 0.5
    %v1533 = vmul.f32 %v1443, 0.5
    %v1534 = vmul.f32 %v1448, 0.5
    %v1535 = vmul.f32 %v1453, 0.5
    %v1536 = vmul.f32 %v1458, 0.5
    %v1537 = vmul.f32 %v1463, 0.5
    %v1538 = vmul.f32 %v1468, 0.5
    %v1539 = vmul.f32 %v1473, 0.5
    %v1540 = vmul.f32 %v1478, 0.5
    %v1541 = vmul.f32 %v1483, 0.5
    %v1542 = vmul.f32 %v1488, 0.5
    %v1543 = vmul.f32 %v1493, 0.5
    %v1544 = vmul.f32 %v1498, 0.5
    %v1545 = vmul.f32 %v1503, 0.5
    %v1546 = vmul.f32 %v1508, 0.5
    %v1547 = vmul.f32 %v1513, 0.5
    %v1548 = vtanh.pop %v1516
    %v1549 = vtanh.pop %v1517
    %v1550 = vtanh.pop %v1518
    %v1551 = vtanh.pop %v1519
    %v1552 = vtanh.pop %v1520
    %v1553 = vtanh.pop %v1521
    %v1554 = vtanh.pop %v1522
    %v1555 = vtanh.pop %v1523
    %v1556 = vtanh.pop %v1524
    %v1557 = vtanh.pop %v1525
    %v1558 = vtanh.pop %v1526
    %v1559 = vtanh.pop %v1527
    %v1560 = vtanh.pop %v1528
    %v1561 = vtanh.pop %v1529
    %v1562 = vtanh.pop %v1530
    %v1563 = vtanh.pop %v1531
    %v1564 = vtanh.pop %v1532
    %v1565 = vtanh.pop %v1533
    %v1566 = vtanh.pop %v1534
    %v1567 = vtanh.pop %v1535
    %v1568 = vtanh.pop %v1536
    %v1569 = vtanh.pop %v1537
    %v1570 = vtanh.pop %v1538
    %v1571 = vtanh.pop %v1539
    %v1572 = vtanh.pop %v1540
    %v1573 = vtanh.pop %v1541
    %v1574 = vtanh.pop %v1542
    %v1575 = vtanh.pop %v1543
    %v1576 = vtanh.pop %v1544
    %v1577 = vtanh.pop %v1545
    %v1578 = vtanh.pop %v1546
    %v1579 = vtanh.pop %v1547
    %v1580 = vmul.f32 %v1548, 0.5
    %v1581 = vmul.f32 %v1549, 0.5
    %v1582 = vmul.f32 %v1550, 0.5
    %v1583 = vmul.f32 %v1551, 0.5
    %v1584 = vmul.f32 %v1552, 0.5
    %v1585 = vmul.f32 %v1553, 0.5
    %v1586 = vmul.f32 %v1554, 0.5
    %v1587 = vmul.f32 %v1555, 0.5
    %v1588 = vmul.f32 %v1556, 0.5
    %v1589 = vmul.f32 %v1557, 0.5
    %v1590 = vmul.f32 %v1558, 0.5
    %v1591 = vmul.f32 %v1559, 0.5
    %v1592 = vmul.f32 %v1560, 0.5
    %v1593 = vmul.f32 %v1561, 0.5
    %v1594 = vmul.f32 %v1562, 0.5
    %v1595 = vmul.f32 %v1563, 0.5
    %v1596 = vmul.f32 %v1564, 0.5
    %v1597 = vmul.f32 %v1565, 0.5
    %v1598 = vmul.f32 %v1566, 0.5
    %v1599 = vmul.f32 %v1567, 0.5
    %v1600 = vmul.f32 %v1568, 0.5
    %v1601 = vmul.f32 %v1569, 0.5
    %v1602 = vmul.f32 %v1570, 0.5
    %v1603 = vmul.f32 %v1571, 0.5
    %v1604 = vmul.f32 %v1572, 0.5
    %v1605 = vmul.f32 %v1573, 0.5
    %v1606 = vmul.f32 %v1574, 0.5
    %v1607 = vmul.f32 %v1575, 0.5
    %v1608 = vmul.f32 %v1576, 0.5
    %v1609 = vmul.f32 %v1577, 0.5
    %v1610 = vmul.f32 %v1578, 0.5
    %v1611 = vmul.f32 %v1579, 0.5
    %v1612 = vadd.f32 %v1580, 0.5
    %v1613 = vadd.f32 %v1581, 0.5
    %v1614 = vadd.f32 %v1582, 0.5
    %v1615 = vadd.f32 %v1583, 0.5
    %v1616 = vadd.f32 %v1584, 0.5
    %v1617 = vadd.f32 %v1585, 0.5
    %v1618 = vadd.f32 %v1586, 0.5
    %v1619 = vadd.f32 %v1587, 0.5
    %v1620 = vadd.f32 %v1588, 0.5
    %v1621 = vadd.f32 %v1589, 0.5
    %v1622 = vadd.f32 %v1590, 0.5
    %v1623 = vadd.f32 %v1591, 0.5
    %v1624 = vadd.f32 %v1592, 0.5
    %v1625 = vadd.f32 %v1593, 0.5
    %v1626 = vadd.f32 %v1594, 0.5
    %v1627 = vadd.f32 %v1595, 0.5
    %v1628 = vadd.f32 %v1596, 0.5
    %v1629 = vadd.f32 %v1597, 0.5
    %v1630 = vadd.f32 %v1598, 0.5
    %v1631 = vadd.f32 %v1599, 0.5
    %v1632 = vadd.f32 %v1600, 0.5
    %v1633 = vadd.f32 %v1601, 0.5
    %v1634 = vadd.f32 %v1602, 0.5
    %v1635 = vadd.f32 %v1603, 0.5
    %v1636 = vadd.f32 %v1604, 0.5
    %v1637 = vadd.f32 %v1605, 0.5
    %v1638 = vadd.f32 %v1606, 0.5
    %v1639 = vadd.f32 %v1607, 0.5
    %v1640 = vadd.f32 %v1608, 0.5
    %v1641 = vadd.f32 %v1609, 0.5
    %v1642 = vadd.f32 %v1610, 0.5
    %v1643 = vadd.f32 %v1611, 0.5
    %s1644 = scalar_lea.vmem [#allocation2], 512
    %v1645 = vld [vmem:[%s1644] sm:$0xff]
    %v1646 = vld [vmem:[%s1644 + $0x8] sm:$0xff]
    %v1647 = vld [vmem:[%s1644 + $0x10] sm:$0xff]
    %v1648 = vld [vmem:[%s1644 + $0x18] sm:$0xff]
    %v1649 = vld [vmem:[%s1644 + $0x20] sm:$0xff]
    %v1650 = vld [vmem:[%s1644 + $0x28] sm:$0xff]
    %v1651 = vld [vmem:[%s1644 + $0x30] sm:$0xff]
    %v1652 = vld [vmem:[%s1644 + $0x38] sm:$0xff]
    %v1653 = vld [vmem:[%s1644 + $0x40] sm:$0xff]
    %v1654 = vld [vmem:[%s1644 + $0x48] sm:$0xff]
    %v1655 = vld [vmem:[%s1644 + $0x50] sm:$0xff]
    %v1656 = vld [vmem:[%s1644 + $0x58] sm:$0xff]
    %v1657 = vld [vmem:[%s1644 + $0x60] sm:$0xff]
    %v1658 = vld [vmem:[%s1644 + $0x68] sm:$0xff]
    %v1659 = vld [vmem:[%s1644 + $0x70] sm:$0xff]
    %v1660 = vld [vmem:[%s1644 + $0x78] sm:$0xff]
    %v1661 = vld [vmem:[%s2 + $0x4] sm:$0x1]
    %v1662 = vlaneseq
    %v1663 = vshrl.u32 %v1662, 7
    %v1664 = vsub.s32 0, %v1663
    %v1665 = vrot.slane %v1661, %v1664
    %1666 = vmatprep.subr.mxu0 0.0
    %1667 = vmatpush1.msra.mxu0 %v1660
    %1668 = vmatprep.subr.mxu0 0.0
    %1669 = vmatpush1.msra.mxu0 %v1659
    %1670 = vmatprep.subr.mxu0 0.0
    %1671 = vmatpush1.msra.mxu0 %v1658
    %1672 = vmatprep.subr.mxu0 0.0
    %1673 = vmatpush1.msra.mxu0 %v1657
    %1674 = vmatprep.subr.mxu0 0.0
    %1675 = vmatpush1.msra.mxu0 %v1656
    %1676 = vmatprep.subr.mxu0 0.0
    %1677 = vmatpush1.msra.mxu0 %v1655
    %1678 = vmatprep.subr.mxu0 0.0
    %1679 = vmatpush1.msra.mxu0 %v1654
    %1680 = vmatprep.subr.mxu0 0.0
    %1681 = vmatpush1.msra.mxu0 %v1653
    %1682 = vmatprep.subr.mxu0 0.0
    %1683 = vmatpush1.msra.mxu0 %v1652
    %1684 = vmatprep.subr.mxu0 0.0
    %1685 = vmatpush1.msra.mxu0 %v1651
    %1686 = vmatprep.subr.mxu0 0.0
    %1687 = vmatpush1.msra.mxu0 %v1650
    %1688 = vmatprep.subr.mxu0 0.0
    %1689 = vmatpush1.msra.mxu0 %v1649
    %1690 = vmatprep.subr.mxu0 0.0
    %1691 = vmatpush1.msra.mxu0 %v1648
    %1692 = vmatprep.subr.mxu0 0.0
    %1693 = vmatpush1.msra.mxu0 %v1647
    %1694 = vmatprep.subr.mxu0 0.0
    %1695 = vmatpush1.msra.mxu0 %v1646
    %1696 = vmatprep.subr.mxu0 0.0
    %1697 = vmatpush1.msra.mxu0 %v1645
    %1698 = vmatprep.subr.mxu0 0.0
    %1699 = vmatpush2.msra.mxu0 0.0
    %1700 = vmatprep.subr.mxu0 0.0
    %1701 = vmatpush2.msra.mxu0 0.0
    %1702 = vmatprep.subr.mxu0 0.0
    %1703 = vmatpush2.msra.mxu0 0.0
    %1704 = vmatprep.subr.mxu0 0.0
    %1705 = vmatpush2.msra.mxu0 0.0
    %1706 = vmatprep.subr.mxu0 0.0
    %1707 = vmatpush2.msra.mxu0 0.0
    %1708 = vmatprep.subr.mxu0 0.0
    %1709 = vmatpush2.msra.mxu0 0.0
    %1710 = vmatprep.subr.mxu0 0.0
    %1711 = vmatpush2.msra.mxu0 0.0
    %1712 = vmatprep.subr.mxu0 0.0
    %1713 = vmatpush2.msra.mxu0 0.0
    %1714 = vmatprep.subr.mxu0 0.0
    %1715 = vmatpush2.msra.mxu0 0.0
    %1716 = vmatprep.subr.mxu0 0.0
    %1717 = vmatpush2.msra.mxu0 0.0
    %1718 = vmatprep.subr.mxu0 0.0
    %1719 = vmatpush2.msra.mxu0 0.0
    %1720 = vmatprep.subr.mxu0 0.0
    %1721 = vmatpush2.msra.mxu0 0.0
    %1722 = vmatprep.subr.mxu0 0.0
    %1723 = vmatpush2.msra.mxu0 0.0
    %1724 = vmatprep.subr.mxu0 0.0
    %1725 = vmatpush2.msra.mxu0 0.0
    %1726 = vmatprep.subr.mxu0 0.0
    %1727 = vmatpush2.msra.mxu0 0.0
    %1728 = vmatprep.subr.mxu0 0.0
    %1729 = vmatpush2.msra.mxu0 0.0
    %1730 = vmatprep.mubr.f32.mxu0 0.0
    %1731 = vmatmul.mubr.f32.gmra.mxu0 %v1612
    %v1732 = vpop.f32.mrf.mxu0
    %v1733 = vadd.f32 %v1665, %v1732
    %v1734 = vpop.f32.mrf.mxu0
    %1735 = vmatprep.mubr.f32.mxu0 0.0
    %1736 = vmatmul.mubr.f32.gmra.mxu0 %v1613
    %v1737 = vpop.f32.mrf.mxu0
    %v1738 = vadd.f32 %v1665, %v1737
    %v1739 = vpop.f32.mrf.mxu0
    %1740 = vmatprep.mubr.f32.mxu0 0.0
    %1741 = vmatmul.mubr.f32.gmra.mxu0 %v1614
    %v1742 = vpop.f32.mrf.mxu0
    %v1743 = vadd.f32 %v1665, %v1742
    %v1744 = vpop.f32.mrf.mxu0
    %1745 = vmatprep.mubr.f32.mxu0 0.0
    %1746 = vmatmul.mubr.f32.gmra.mxu0 %v1615
    %v1747 = vpop.f32.mrf.mxu0
    %v1748 = vadd.f32 %v1665, %v1747
    %v1749 = vpop.f32.mrf.mxu0
    %1750 = vmatprep.mubr.f32.mxu0 0.0
    %1751 = vmatmul.mubr.f32.gmra.mxu0 %v1616
    %v1752 = vpop.f32.mrf.mxu0
    %v1753 = vadd.f32 %v1665, %v1752
    %v1754 = vpop.f32.mrf.mxu0
    %1755 = vmatprep.mubr.f32.mxu0 0.0
    %1756 = vmatmul.mubr.f32.gmra.mxu0 %v1617
    %v1757 = vpop.f32.mrf.mxu0
    %v1758 = vadd.f32 %v1665, %v1757
    %v1759 = vpop.f32.mrf.mxu0
    %1760 = vmatprep.mubr.f32.mxu0 0.0
    %1761 = vmatmul.mubr.f32.gmra.mxu0 %v1618
    %v1762 = vpop.f32.mrf.mxu0
    %v1763 = vadd.f32 %v1665, %v1762
    %v1764 = vpop.f32.mrf.mxu0
    %1765 = vmatprep.mubr.f32.mxu0 0.0
    %1766 = vmatmul.mubr.f32.gmra.mxu0 %v1619
    %v1767 = vpop.f32.mrf.mxu0
    %v1768 = vadd.f32 %v1665, %v1767
    %v1769 = vpop.f32.mrf.mxu0
    %1770 = vmatprep.mubr.f32.mxu0 0.0
    %1771 = vmatmul.mubr.f32.gmra.mxu0 %v1620
    %v1772 = vpop.f32.mrf.mxu0
    %v1773 = vadd.f32 %v1665, %v1772
    %v1774 = vpop.f32.mrf.mxu0
    %1775 = vmatprep.mubr.f32.mxu0 0.0
    %1776 = vmatmul.mubr.f32.gmra.mxu0 %v1621
    %v1777 = vpop.f32.mrf.mxu0
    %v1778 = vadd.f32 %v1665, %v1777
    %v1779 = vpop.f32.mrf.mxu0
    %1780 = vmatprep.mubr.f32.mxu0 0.0
    %1781 = vmatmul.mubr.f32.gmra.mxu0 %v1622
    %v1782 = vpop.f32.mrf.mxu0
    %v1783 = vadd.f32 %v1665, %v1782
    %v1784 = vpop.f32.mrf.mxu0
    %1785 = vmatprep.mubr.f32.mxu0 0.0
    %1786 = vmatmul.mubr.f32.gmra.mxu0 %v1623
    %v1787 = vpop.f32.mrf.mxu0
    %v1788 = vadd.f32 %v1665, %v1787
    %v1789 = vpop.f32.mrf.mxu0
    %1790 = vmatprep.mubr.f32.mxu0 0.0
    %1791 = vmatmul.mubr.f32.gmra.mxu0 %v1624
    %v1792 = vpop.f32.mrf.mxu0
    %v1793 = vadd.f32 %v1665, %v1792
    %v1794 = vpop.f32.mrf.mxu0
    %1795 = vmatprep.mubr.f32.mxu0 0.0
    %1796 = vmatmul.mubr.f32.gmra.mxu0 %v1625
    %v1797 = vpop.f32.mrf.mxu0
    %v1798 = vadd.f32 %v1665, %v1797
    %v1799 = vpop.f32.mrf.mxu0
    %1800 = vmatprep.mubr.f32.mxu0 0.0
    %1801 = vmatmul.mubr.f32.gmra.mxu0 %v1626
    %v1802 = vpop.f32.mrf.mxu0
    %v1803 = vadd.f32 %v1665, %v1802
    %v1804 = vpop.f32.mrf.mxu0
    %1805 = vmatprep.mubr.f32.mxu0 0.0
    %1806 = vmatmul.mubr.f32.gmra.mxu0 %v1627
    %v1807 = vpop.f32.mrf.mxu0
    %v1808 = vadd.f32 %v1665, %v1807
    %v1809 = vpop.f32.mrf.mxu0
    %1810 = vmatprep.mubr.f32.mxu0 0.0
    %1811 = vmatmul.mubr.f32.gmra.mxu0 %v1628
    %v1812 = vpop.f32.mrf.mxu0
    %v1813 = vadd.f32 %v1665, %v1812
    %v1814 = vpop.f32.mrf.mxu0
    %1815 = vmatprep.mubr.f32.mxu0 0.0
    %1816 = vmatmul.mubr.f32.gmra.mxu0 %v1629
    %v1817 = vpop.f32.mrf.mxu0
    %v1818 = vadd.f32 %v1665, %v1817
    %v1819 = vpop.f32.mrf.mxu0
    %1820 = vmatprep.mubr.f32.mxu0 0.0
    %1821 = vmatmul.mubr.f32.gmra.mxu0 %v1630
    %v1822 = vpop.f32.mrf.mxu0
    %v1823 = vadd.f32 %v1665, %v1822
    %v1824 = vpop.f32.mrf.mxu0
    %1825 = vmatprep.mubr.f32.mxu0 0.0
    %1826 = vmatmul.mubr.f32.gmra.mxu0 %v1631
    %v1827 = vpop.f32.mrf.mxu0
    %v1828 = vadd.f32 %v1665, %v1827
    %v1829 = vpop.f32.mrf.mxu0
    %1830 = vmatprep.mubr.f32.mxu0 0.0
    %1831 = vmatmul.mubr.f32.gmra.mxu0 %v1632
    %v1832 = vpop.f32.mrf.mxu0
    %v1833 = vadd.f32 %v1665, %v1832
    %v1834 = vpop.f32.mrf.mxu0
    %1835 = vmatprep.mubr.f32.mxu0 0.0
    %1836 = vmatmul.mubr.f32.gmra.mxu0 %v1633
    %v1837 = vpop.f32.mrf.mxu0
    %v1838 = vadd.f32 %v1665, %v1837
    %v1839 = vpop.f32.mrf.mxu0
    %1840 = vmatprep.mubr.f32.mxu0 0.0
    %1841 = vmatmul.mubr.f32.gmra.mxu0 %v1634
    %v1842 = vpop.f32.mrf.mxu0
    %v1843 = vadd.f32 %v1665, %v1842
    %v1844 = vpop.f32.mrf.mxu0
    %1845 = vmatprep.mubr.f32.mxu0 0.0
    %1846 = vmatmul.mubr.f32.gmra.mxu0 %v1635
    %v1847 = vpop.f32.mrf.mxu0
    %v1848 = vadd.f32 %v1665, %v1847
    %v1849 = vpop.f32.mrf.mxu0
    %1850 = vmatprep.mubr.f32.mxu0 0.0
    %1851 = vmatmul.mubr.f32.gmra.mxu0 %v1636
    %v1852 = vpop.f32.mrf.mxu0
    %v1853 = vadd.f32 %v1665, %v1852
    %v1854 = vpop.f32.mrf.mxu0
    %1855 = vmatprep.mubr.f32.mxu0 0.0
    %1856 = vmatmul.mubr.f32.gmra.mxu0 %v1637
    %v1857 = vpop.f32.mrf.mxu0
    %v1858 = vadd.f32 %v1665, %v1857
    %v1859 = vpop.f32.mrf.mxu0
    %1860 = vmatprep.mubr.f32.mxu0 0.0
    %1861 = vmatmul.mubr.f32.gmra.mxu0 %v1638
    %v1862 = vpop.f32.mrf.mxu0
    %v1863 = vadd.f32 %v1665, %v1862
    %v1864 = vpop.f32.mrf.mxu0
    %1865 = vmatprep.mubr.f32.mxu0 0.0
    %1866 = vmatmul.mubr.f32.gmra.mxu0 %v1639
    %v1867 = vpop.f32.mrf.mxu0
    %v1868 = vadd.f32 %v1665, %v1867
    %v1869 = vpop.f32.mrf.mxu0
    %1870 = vmatprep.mubr.f32.mxu0 0.0
    %1871 = vmatmul.mubr.f32.gmra.mxu0 %v1640
    %v1872 = vpop.f32.mrf.mxu0
    %v1873 = vadd.f32 %v1665, %v1872
    %v1874 = vpop.f32.mrf.mxu0
    %1875 = vmatprep.mubr.f32.mxu0 0.0
    %1876 = vmatmul.mubr.f32.gmra.mxu0 %v1641
    %v1877 = vpop.f32.mrf.mxu0
    %v1878 = vadd.f32 %v1665, %v1877
    %v1879 = vpop.f32.mrf.mxu0
    %1880 = vmatprep.mubr.f32.mxu0 0.0
    %1881 = vmatmul.mubr.f32.gmra.mxu0 %v1642
    %v1882 = vpop.f32.mrf.mxu0
    %v1883 = vadd.f32 %v1665, %v1882
    %v1884 = vpop.f32.mrf.mxu0
    %1885 = vmatprep.mubr.f32.mxu0 0.0
    %1886 = vmatmul.mubr.f32.gmra.mxu0 %v1643
    %v1887 = vpop.f32.mrf.mxu0
    %v1888 = vadd.f32 %v1665, %v1887
    %v1889 = vpop.f32.mrf.mxu0
    %1890 = vdwg.mxu0
    %1891 = vst [vmem:[%s3] sm:$0xff] %v1733
    %1892 = vst [vmem:[%s3 + $0x8] sm:$0xff] %v1738
    %1893 = vst [vmem:[%s3 + $0x10] sm:$0xff] %v1743
    %1894 = vst [vmem:[%s3 + $0x18] sm:$0xff] %v1748
    %1895 = vst [vmem:[%s3 + $0x20] sm:$0xff] %v1753
    %1896 = vst [vmem:[%s3 + $0x28] sm:$0xff] %v1758
    %1897 = vst [vmem:[%s3 + $0x30] sm:$0xff] %v1763
    %1898 = vst [vmem:[%s3 + $0x38] sm:$0xff] %v1768
    %1899 = vst [vmem:[%s3 + $0x40] sm:$0xff] %v1773
    %1900 = vst [vmem:[%s3 + $0x48] sm:$0xff] %v1778
    %1901 = vst [vmem:[%s3 + $0x50] sm:$0xff] %v1783
    %1902 = vst [vmem:[%s3 + $0x58] sm:$0xff] %v1788
    %1903 = vst [vmem:[%s3 + $0x60] sm:$0xff] %v1793
    %1904 = vst [vmem:[%s3 + $0x68] sm:$0xff] %v1798
    %1905 = vst [vmem:[%s3 + $0x70] sm:$0xff] %v1803
    %1906 = vst [vmem:[%s3 + $0x78] sm:$0xff] %v1808
    %1907 = vst [vmem:[%s3 + $0x80] sm:$0xff] %v1813
    %1908 = vst [vmem:[%s3 + $0x88] sm:$0xff] %v1818
    %1909 = vst [vmem:[%s3 + $0x90] sm:$0xff] %v1823
    %1910 = vst [vmem:[%s3 + $0x98] sm:$0xff] %v1828
    %1911 = vst [vmem:[%s3 + $0xa0] sm:$0xff] %v1833
    %1912 = vst [vmem:[%s3 + $0xa8] sm:$0xff] %v1838
    %1913 = vst [vmem:[%s3 + $0xb0] sm:$0xff] %v1843
    %1914 = vst [vmem:[%s3 + $0xb8] sm:$0xff] %v1848
    %1915 = vst [vmem:[%s3 + $0xc0] sm:$0xff] %v1853
    %1916 = vst [vmem:[%s3 + $0xc8] sm:$0xff] %v1858
    %1917 = vst [vmem:[%s3 + $0xd0] sm:$0xff] %v1863
    %1918 = vst [vmem:[%s3 + $0xd8] sm:$0xff] %v1868
    %1919 = vst [vmem:[%s3 + $0xe0] sm:$0xff] %v1873
    %1920 = vst [vmem:[%s3 + $0xe8] sm:$0xff] %v1878
    %1921 = vst [vmem:[%s3 + $0xf0] sm:$0xff] %v1883
    %1922 = vst [vmem:[%s3 + $0xf8] sm:$0xff] %v1888
    // Predicated region
    $region18: #{fnn_forward.1} parent=1 // pred_check
      _
    $region19: #{fnn_forward.1} parent=1 // pred_check_branch
      %1924 = sbr.rel (0) target = $region21
    $region20: #{fnn_forward.1} parent=1 // pred_region
      _
    $region21: #{fnn_forward.1} parent=1 // pred_fallthru
      _
    // Predicated region
    $region22: #{fnn_forward.1} parent=1 // pred_check
      _
    $region23: #{fnn_forward.1} parent=1 // pred_check_branch
      %1926 = sbr.rel (0) target = $region25
    $region24: #{fnn_forward.1} parent=1 // pred_region
      _
    $region25: #{fnn_forward.1} parent=1 // pred_fallthru
      _
    %1927 = vsyncpa [#allocation3], 1

</llo_original>
